<compile_context>
chip_gen: v6e
topology: v6e:2x2x1
jax: 0.10.0
libtpu: 0.0.40
codegen_flags: <defaults>
</compile_context>

<pallas_src>
import functools
import math

import jax
import jax.numpy as jnp
from jax import lax
from jax.experimental import pallas as pl

# ---- model hyper-parameters (small, deterministic, synthetic) ---------------
D_MODEL = 32
HEADS = 4
D_HEAD = D_MODEL // HEADS
D_FF = 64
T_LEN = 8
BATCH = 2
NEG_INF = -1e18
LN_EPS = 1e-6

# ---- consts-slab row map (all rows start at lane 0) --------------------------
ROW_B_QKV = 0      # (3*D,)   fused qkv bias, bq pre-scaled
ROW_B_O = 1        # (D,)
ROW_B1 = 2         # (D_FF,)
ROW_B2 = 3         # (D,)
ROW_LN_G = 4       # (D,)
ROW_LN_B = 5       # (D,)
ROW_LNF_G = 6      # (D,)
ROW_LNF_B = 7      # (D,)
ROW_ATTN_BIAS = 8  # rows 8 : 8+B*T, cols 0 : B*T  (additive score bias)


# ---- math helpers used inside the kernel ------------------------------------
def _layer_norm(x, g, b):
    mu = jnp.mean(x, axis=-1, keepdims=True)
    var = jnp.mean((x - mu) ** 2, axis=-1, keepdims=True)
    return (x - mu) * lax.rsqrt(var + LN_EPS) * g + b


def _gelu(x):
    # PreSumm-style tanh approximation of GELU.
    return 0.5 * x * (1.0 + jnp.tanh(math.sqrt(2.0 / math.pi) * (x + 0.044715 * x ** 3)))


# ---- the Pallas kernel: whole layer, single invocation (grid=()) -------------
def encoder_layer_kernel(x_ref, w_ref, w2_ref, c_ref, out_ref, *, apply_layer_norm):
    bt, d = x_ref.shape            # (B*T, D)
    dh = D_HEAD

    x = x_ref[...]

    # layer_norm only when iter != 0 (resolved statically at trace time)
    if apply_layer_norm:
        x_norm = _layer_norm(x, c_ref[ROW_LN_G:ROW_LN_G + 1, 0:d],
                             c_ref[ROW_LN_B:ROW_LN_B + 1, 0:d])
    else:
        x_norm = x

    # ---- self-attention ------------------------------------------------------
    # fused QKV projection: ONE 2-D MXU matmul (scale already folded into Wq/bq)
    qkv = jnp.dot(x_norm, w_ref[:, 0:3 * d],
                  preferred_element_type=jnp.float32) + c_ref[ROW_B_QKV:ROW_B_QKV + 1, 0:3 * d]

    # head-batched views via static 8-lane-aligned slices (head-major columns)
    q3 = jnp.stack([qkv[:, hh * dh:(hh + 1) * dh] for hh in range(HEADS)], axis=0)          # (H, BT, dh)
    k3 = jnp.stack([qkv[:, d + hh * dh:d + (hh + 1) * dh] for hh in range(HEADS)], axis=0)   # (H, BT, dh)
    v3 = jnp.stack([qkv[:, 2 * d + hh * dh:2 * d + (hh + 1) * dh] for hh in range(HEADS)], axis=0)

    # scores over the flattened B*T key axis; cross-batch pairs and padded keys
    # are suppressed by the precomputed additive bias (1 add, no cmp/select)
    s = lax.dot_general(q3, k3, (((2,), (2,)), ((0,), (0,))),
                        preferred_element_type=jnp.float32)                 # (H, BT, BT)
    s = s + c_ref[ROW_ATTN_BIAS:ROW_ATTN_BIAS + bt, 0:bt]                   # (BT, BT) bcast over heads

    # softmax; the divide goes to the EUP via approx reciprocal
    m = jnp.max(s, axis=-1, keepdims=True)
    e = jnp.exp(s - m)
    p = e * pl.reciprocal(jnp.sum(e, axis=-1, keepdims=True), approx=True)

    ctx3 = lax.dot_general(p, v3, (((2,), (1,)), ((0,), (0,))),
                           preferred_element_type=jnp.float32)              # (H, BT, dh)

    # merge heads back to (BT, D) and apply the full K=D output projection
    ctx = jnp.concatenate([ctx3[hh] for hh in range(HEADS)], axis=-1)       # (BT, D)
    context = jnp.dot(ctx, w_ref[:, 3 * d:4 * d],
                      preferred_element_type=jnp.float32) + c_ref[ROW_B_O:ROW_B_O + 1, 0:d]

    # dropout == identity (eval mode); residual
    attn_out = context + x

    # ---- position-wise feed-forward: LN -> w1 -> gelu -> w2 -> residual ------
    ffn_norm = _layer_norm(attn_out, c_ref[ROW_LNF_G:ROW_LNF_G + 1, 0:d],
                           c_ref[ROW_LNF_B:ROW_LNF_B + 1, 0:d])
    inter = _gelu(jnp.dot(ffn_norm, w_ref[:, 4 * d:4 * d + D_FF],
                          preferred_element_type=jnp.float32) + c_ref[ROW_B1:ROW_B1 + 1, 0:D_FF])
    y = jnp.dot(inter, w2_ref[...],
                preferred_element_type=jnp.float32) + c_ref[ROW_B2:ROW_B2 + 1, 0:d] + attn_out

    # lane-dense (rows, n_grp*D) store: pack row-groups of D lanes side by side
    rows = out_ref.shape[0]
    n_grp = out_ref.shape[1] // d
    out_ref[...] = jnp.concatenate([y[g * rows:(g + 1) * rows] for g in range(n_grp)], axis=1)


# ---- wrapper: layout plumbing lives out here ---------------------------------
def transformer_encoder_layer(iter_idx, inputs, mask, params):
    """inputs: (B, T, D) f32; mask: (B, T), 1 == padded key position."""
    B, T, D = inputs.shape
    BT = B * T
    dh = D // HEADS
    inv = 1.0 / math.sqrt(dh)

    # one lane-dense weight slab: [Wq*inv | Wk | Wv | Wo | W1]  -> (D, 4D + D_FF)
    w_a = jnp.concatenate([params["wq"] * inv, params["wk"], params["wv"],
                           params["wo"], params["w1"]], axis=1)
    w2 = params["w2"]                                         # (D_FF, D)

    # additive attention bias over the flattened key axis:
    # 0 where (same batch AND key not padded), else -1e18
    row_ids = jnp.arange(BT) // T
    same_batch = row_ids[:, None] == row_ids[None, :]
    key_ok = (mask.reshape(BT) == 0)[None, :]
    attn_bias = jnp.where(same_batch & key_ok, 0.0, NEG_INF).astype(jnp.float32)   # (BT, BT)

    # one consts slab: every bias / LN param / the attention bias  -> (8+BT, 3D)
    consts = jnp.zeros((8 + BT, 3 * D), jnp.float32)
    consts = consts.at[ROW_B_QKV, 0:3 * D].set(
        jnp.concatenate([params["bq"] * inv, params["bk"], params["bv"]]))
    consts = consts.at[ROW_B_O, 0:D].set(params["bo"])
    consts = consts.at[ROW_B1, 0:D_FF].set(params["b1"])
    consts = consts.at[ROW_B2, 0:D].set(params["b2"])
    consts = consts.at[ROW_LN_G, 0:D].set(params["ln_g"])
    consts = consts.at[ROW_LN_B, 0:D].set(params["ln_b"])
    consts = consts.at[ROW_LNF_G, 0:D].set(params["ln_ff_g"])
    consts = consts.at[ROW_LNF_B, 0:D].set(params["ln_ff_b"])
    consts = consts.at[ROW_ATTN_BIAS:ROW_ATTN_BIAS + BT, 0:BT].set(attn_bias)

    x2d = inputs.reshape(BT, D)                               # flatten batch into rows

    n_grp = 128 // D                                          # 4 row-groups per slab row
    rows = BT // n_grp                                        # 4 slab rows

    kernel = functools.partial(encoder_layer_kernel,
                               apply_layer_norm=(iter_idx != 0))

    out_slab = pl.pallas_call(
        kernel,
        out_shape=jax.ShapeDtypeStruct((rows, n_grp * D), jnp.float32),
    )(x2d, w_a, w2, consts)

    # undo the lane-dense packing: out_slab[r, g*D + d] = y[g*rows + r, d]
    y = out_slab.reshape(rows, n_grp, D).transpose(1, 0, 2).reshape(BT, D)
    return y.reshape(B, T, D)


# ---- pure-JAX reference (torch semantics) ------------------------------------
def _ref_forward(iter_idx, inputs, mask, p):
    B, T, D = inputs.shape
    H = HEADS
    dh = D // H
    x_norm = _layer_norm(inputs, p["ln_g"], p["ln_b"]) if iter_idx != 0 else inputs

    q = (x_norm @ p["wq"] + p["bq"]) / math.sqrt(dh)
    k = x_norm @ p["wk"] + p["bk"]
    v = x_norm @ p["wv"] + p["bv"]

    def heads(m):
        return m.reshape(B, T, H, dh).transpose(0, 2, 1, 3)

    qh, kh, vh = heads(q), heads(k), heads(v)
    s = jnp.einsum('bhqd,bhkd->bhqk', qh, kh)
    s = jnp.where(mask[:, None, None, :] > 0, NEG_INF, s)
    a = jax.nn.softmax(s, axis=-1)
    ctx = jnp.einsum('bhqk,bhkd->bhqd', a, vh)
    ctx = ctx.transpose(0, 2, 1, 3).reshape(B, T, D)
    context = ctx @ p["wo"] + p["bo"]
    out = context + inputs                       # dropout == identity
    ffn_norm = _layer_norm(out, p["ln_ff_g"], p["ln_ff_b"])
    inter = _gelu(ffn_norm @ p["w1"] + p["b1"])
    return inter @ p["w2"] + p["b2"] + out


# ---- main ---------------------------------------------------------------------
if __name__ == "__main__":
    key = jax.random.PRNGKey(0)
    ks = jax.random.split(key, 13)

    params = {
        "wq": 0.05 * jax.random.normal(ks[0], (D_MODEL, D_MODEL), jnp.float32),
        "wk": 0.05 * jax.random.normal(ks[1], (D_MODEL, D_MODEL), jnp.float32),
        "wv": 0.05 * jax.random.normal(ks[2], (D_MODEL, D_MODEL), jnp.float32),
        "wo": 0.05 * jax.random.normal(ks[3], (D_MODEL, D_MODEL), jnp.float32),
        "bq": 0.05 * jax.random.normal(ks[4], (D_MODEL,), jnp.float32),
        "bk": 0.05 * jax.random.normal(ks[5], (D_MODEL,), jnp.float32),
        "bv": 0.05 * jax.random.normal(ks[6], (D_MODEL,), jnp.float32),
        "bo": 0.05 * jax.random.normal(ks[7], (D_MODEL,), jnp.float32),
        "ln_g": jnp.ones((D_MODEL,), jnp.float32),
        "ln_b": jnp.zeros((D_MODEL,), jnp.float32),
        "ln_ff_g": jnp.ones((D_MODEL,), jnp.float32),
        "ln_ff_b": jnp.zeros((D_MODEL,), jnp.float32),
        "w1": 0.05 * jax.random.normal(ks[8], (D_MODEL, D_FF), jnp.float32),
        "b1": 0.05 * jax.random.normal(ks[9], (D_FF,), jnp.float32),
        "w2": 0.05 * jax.random.normal(ks[10], (D_FF, D_MODEL), jnp.float32),
        "b2": 0.05 * jax.random.normal(ks[11], (D_MODEL,), jnp.float32),
    }

    inputs = jax.random.normal(ks[12], (BATCH, T_LEN, D_MODEL), jnp.float32)
    # key-padding mask: last 3 positions of batch 1 are padding (1 == masked)
    mask = jnp.zeros((BATCH, T_LEN), jnp.int32).at[1, T_LEN - 3:].set(1)

    for it in (0, 1):   # iter == 0 (no pre-LN) and iter != 0 (with pre-LN)
        out = transformer_encoder_layer(it, inputs, mask, params)
        jax.block_until_ready(out)
        ref = _ref_forward(it, inputs, mask, params)
        assert jnp.allclose(out, ref, atol=5e-3, rtol=5e-3), f"mismatch at iter={it}"

    print("KERNEL_OK")
</pallas_src>

<mosaic_0001>
module attributes {stable_mosaic.version = 11 : i64} {
  func.func @encoder_layer_kernel(%arg0: memref<16x32xf32, #tpu.memory_space<vmem>>, %arg1: memref<32x192xf32, #tpu.memory_space<vmem>>, %arg2: memref<64x32xf32, #tpu.memory_space<vmem>>, %arg3: memref<24x96xf32, #tpu.memory_space<vmem>>, %arg4: memref<4x128xf32, #tpu.memory_space<vmem>>) attributes {dimension_semantics = [], scalar_prefetch = 0 : i64, scratch_operands = 0 : i64, tpu.core_type = #tpu.core_type<tc>} {
    %c0 = arith.constant 0 : index
    %c0_0 = arith.constant 0 : index
    %0 = vector.load %arg0[%c0, %c0_0] : memref<16x32xf32, #tpu.memory_space<vmem>>, vector<16x32xf32>
    %c0_1 = arith.constant 0 : index
    %c0_2 = arith.constant 0 : index
    %1 = vector.load %arg1[%c0_1, %c0_2] : memref<32x192xf32, #tpu.memory_space<vmem>>, vector<32x96xf32>
    %cst = arith.constant dense<0.000000e+00> : vector<16x96xf32>
    %2 = tpu.matmul %0, %1, %cst {dimension_numbers = #tpu.dot_dimension_numbers<[1], [0], [0], [1], [0, 0, 1, 1], [], []>} : vector<16x32xf32>, vector<32x96xf32>, vector<16x96xf32> -> vector<16x96xf32>
    %c0_3 = arith.constant 0 : index
    %c0_4 = arith.constant 0 : index
    %3 = vector.load %arg3[%c0_3, %c0_4] : memref<24x96xf32, #tpu.memory_space<vmem>>, vector<1x96xf32>
    %4 = vector.broadcast %3 : vector<1x96xf32> to vector<16x96xf32>
    %5 = arith.addf %2, %4 : vector<16x96xf32>
    %6 = vector.extract_strided_slice %5 {offsets = [0, 0], sizes = [16, 8], strides = [1, 1]} : vector<16x96xf32> to vector<16x8xf32>
    %7 = vector.extract_strided_slice %5 {offsets = [0, 8], sizes = [16, 8], strides = [1, 1]} : vector<16x96xf32> to vector<16x8xf32>
    %8 = vector.extract_strided_slice %5 {offsets = [0, 16], sizes = [16, 8], strides = [1, 1]} : vector<16x96xf32> to vector<16x8xf32>
    %9 = vector.extract_strided_slice %5 {offsets = [0, 24], sizes = [16, 8], strides = [1, 1]} : vector<16x96xf32> to vector<16x8xf32>
    %10 = vector.shape_cast %6 : vector<16x8xf32> to vector<1x16x8xf32>
    %11 = vector.shape_cast %7 : vector<16x8xf32> to vector<1x16x8xf32>
    %12 = vector.shape_cast %8 : vector<16x8xf32> to vector<1x16x8xf32>
    %13 = vector.shape_cast %9 : vector<16x8xf32> to vector<1x16x8xf32>
    %14 = tpu.concatenate %10, %11, %12, %13 in 0 : vector<1x16x8xf32>, vector<1x16x8xf32>, vector<1x16x8xf32>, vector<1x16x8xf32> -> vector<4x16x8xf32>
    %15 = vector.extract_strided_slice %5 {offsets = [0, 32], sizes = [16, 8], strides = [1, 1]} : vector<16x96xf32> to vector<16x8xf32>
    %16 = vector.extract_strided_slice %5 {offsets = [0, 40], sizes = [16, 8], strides = [1, 1]} : vector<16x96xf32> to vector<16x8xf32>
    %17 = vector.extract_strided_slice %5 {offsets = [0, 48], sizes = [16, 8], strides = [1, 1]} : vector<16x96xf32> to vector<16x8xf32>
    %18 = vector.extract_strided_slice %5 {offsets = [0, 56], sizes = [16, 8], strides = [1, 1]} : vector<16x96xf32> to vector<16x8xf32>
    %19 = vector.shape_cast %15 : vector<16x8xf32> to vector<1x16x8xf32>
    %20 = vector.shape_cast %16 : vector<16x8xf32> to vector<1x16x8xf32>
    %21 = vector.shape_cast %17 : vector<16x8xf32> to vector<1x16x8xf32>
    %22 = vector.shape_cast %18 : vector<16x8xf32> to vector<1x16x8xf32>
    %23 = tpu.concatenate %19, %20, %21, %22 in 0 : vector<1x16x8xf32>, vector<1x16x8xf32>, vector<1x16x8xf32>, vector<1x16x8xf32> -> vector<4x16x8xf32>
    %24 = vector.extract_strided_slice %5 {offsets = [0, 64], sizes = [16, 8], strides = [1, 1]} : vector<16x96xf32> to vector<16x8xf32>
    %25 = vector.extract_strided_slice %5 {offsets = [0, 72], sizes = [16, 8], strides = [1, 1]} : vector<16x96xf32> to vector<16x8xf32>
    %26 = vector.extract_strided_slice %5 {offsets = [0, 80], sizes = [16, 8], strides = [1, 1]} : vector<16x96xf32> to vector<16x8xf32>
    %27 = vector.extract_strided_slice %5 {offsets = [0, 88], sizes = [16, 8], strides = [1, 1]} : vector<16x96xf32> to vector<16x8xf32>
    %28 = vector.shape_cast %24 : vector<16x8xf32> to vector<1x16x8xf32>
    %29 = vector.shape_cast %25 : vector<16x8xf32> to vector<1x16x8xf32>
    %30 = vector.shape_cast %26 : vector<16x8xf32> to vector<1x16x8xf32>
    %31 = vector.shape_cast %27 : vector<16x8xf32> to vector<1x16x8xf32>
    %32 = tpu.concatenate %28, %29, %30, %31 in 0 : vector<1x16x8xf32>, vector<1x16x8xf32>, vector<1x16x8xf32>, vector<1x16x8xf32> -> vector<4x16x8xf32>
    %cst_5 = arith.constant dense<0.000000e+00> : vector<4x16x16xf32>
    %33 = tpu.matmul %14, %23, %cst_5 {dimension_numbers = #tpu.dot_dimension_numbers<[2], [2], [1], [1], [0, 0, 0, 1, 1, 1], [0], [0]>} : vector<4x16x8xf32>, vector<4x16x8xf32>, vector<4x16x16xf32> -> vector<4x16x16xf32>
    %c8 = arith.constant 8 : index
    %c0_6 = arith.constant 0 : index
    %34 = vector.load %arg3[%c8, %c0_6] : memref<24x96xf32, #tpu.memory_space<vmem>>, vector<16x16xf32>
    %35 = vector.shape_cast %34 : vector<16x16xf32> to vector<1x16x16xf32>
    %36 = vector.broadcast %35 : vector<1x16x16xf32> to vector<4x16x16xf32>
    %37 = arith.addf %33, %36 : vector<4x16x16xf32>
    %cst_7 = arith.constant dense<0xFF800000> : vector<4x16xf32>
    %38 = vector.multi_reduction <maximumf>, %37, %cst_7 [2] : vector<4x16x16xf32> to vector<4x16xf32>
    %39 = vector.shape_cast %38 : vector<4x16xf32> to vector<4x16x1xf32>
    %40 = vector.broadcast %39 : vector<4x16x1xf32> to vector<4x16x16xf32>
    %41 = arith.subf %37, %40 : vector<4x16x16xf32>
    %42 = math.exp %41 : vector<4x16x16xf32>
    %cst_8 = arith.constant dense<0.000000e+00> : vector<4x16xf32>
    %43 = vector.multi_reduction <add>, %42, %cst_8 [2] : vector<4x16x16xf32> to vector<4x16xf32>
    %44 = vector.shape_cast %43 : vector<4x16xf32> to vector<4x16x1xf32>
    %45 = tpu.reciprocal %44 {approx = true} : vector<4x16x1xf32> -> vector<4x16x1xf32>
    %46 = vector.broadcast %45 : vector<4x16x1xf32> to vector<4x16x16xf32>
    %47 = arith.mulf %42, %46 : vector<4x16x16xf32>
    %cst_9 = arith.constant dense<0.000000e+00> : vector<4x16x8xf32>
    %48 = tpu.matmul %47, %32, %cst_9 {dimension_numbers = #tpu.dot_dimension_numbers<[2], [1], [1], [2], [0, 0, 0, 1, 1, 2], [0], [0]>} : vector<4x16x16xf32>, vector<4x16x8xf32>, vector<4x16x8xf32> -> vector<4x16x8xf32>
    %49 = vector.extract_strided_slice %48 {offsets = [0, 0, 0], sizes = [1, 16, 8], strides = [1, 1, 1]} : vector<4x16x8xf32> to vector<1x16x8xf32>
    %50 = vector.shape_cast %49 : vector<1x16x8xf32> to vector<16x8xf32>
    %51 = vector.extract_strided_slice %48 {offsets = [1, 0, 0], sizes = [1, 16, 8], strides = [1, 1, 1]} : vector<4x16x8xf32> to vector<1x16x8xf32>
    %52 = vector.shape_cast %51 : vector<1x16x8xf32> to vector<16x8xf32>
    %53 = vector.extract_strided_slice %48 {offsets = [2, 0, 0], sizes = [1, 16, 8], strides = [1, 1, 1]} : vector<4x16x8xf32> to vector<1x16x8xf32>
    %54 = vector.shape_cast %53 : vector<1x16x8xf32> to vector<16x8xf32>
    %55 = vector.extract_strided_slice %48 {offsets = [3, 0, 0], sizes = [1, 16, 8], strides = [1, 1, 1]} : vector<4x16x8xf32> to vector<1x16x8xf32>
    %56 = vector.shape_cast %55 : vector<1x16x8xf32> to vector<16x8xf32>
    %57 = tpu.concatenate %50, %52, %54, %56 in 1 : vector<16x8xf32>, vector<16x8xf32>, vector<16x8xf32>, vector<16x8xf32> -> vector<16x32xf32>
    %c0_10 = arith.constant 0 : index
    %c96 = arith.constant 96 : index
    %58 = vector.load %arg1[%c0_10, %c96] : memref<32x192xf32, #tpu.memory_space<vmem>>, vector<32x32xf32>
    %cst_11 = arith.constant dense<0.000000e+00> : vector<16x32xf32>
    %59 = tpu.matmul %57, %58, %cst_11 {dimension_numbers = #tpu.dot_dimension_numbers<[1], [0], [0], [1], [0, 0, 1, 1], [], []>} : vector<16x32xf32>, vector<32x32xf32>, vector<16x32xf32> -> vector<16x32xf32>
    %c1 = arith.constant 1 : index
    %c0_12 = arith.constant 0 : index
    %60 = vector.load %arg3[%c1, %c0_12] : memref<24x96xf32, #tpu.memory_space<vmem>>, vector<1x32xf32>
    %61 = vector.broadcast %60 : vector<1x32xf32> to vector<16x32xf32>
    %62 = arith.addf %59, %61 : vector<16x32xf32>
    %63 = arith.addf %62, %0 : vector<16x32xf32>
    %c6 = arith.constant 6 : index
    %c0_13 = arith.constant 0 : index
    %64 = vector.load %arg3[%c6, %c0_13] : memref<24x96xf32, #tpu.memory_space<vmem>>, vector<1x32xf32>
    %c7 = arith.constant 7 : index
    %c0_14 = arith.constant 0 : index
    %65 = vector.load %arg3[%c7, %c0_14] : memref<24x96xf32, #tpu.memory_space<vmem>>, vector<1x32xf32>
    %cst_15 = arith.constant dense<0.000000e+00> : vector<16xf32>
    %66 = vector.multi_reduction <add>, %63, %cst_15 [1] : vector<16x32xf32> to vector<16xf32>
    %67 = vector.shape_cast %66 : vector<16xf32> to vector<16x1xf32>
    %cst_16 = arith.constant 3.200000e+01 : f32
    %68 = vector.broadcast %cst_16 : f32 to vector<16x1xf32>
    %69 = arith.divf %67, %68 : vector<16x1xf32>
    %70 = vector.broadcast %69 : vector<16x1xf32> to vector<16x32xf32>
    %71 = arith.subf %63, %70 : vector<16x32xf32>
    %72 = arith.mulf %71, %71 : vector<16x32xf32>
    %cst_17 = arith.constant dense<0.000000e+00> : vector<16xf32>
    %73 = vector.multi_reduction <add>, %72, %cst_17 [1] : vector<16x32xf32> to vector<16xf32>
    %74 = vector.shape_cast %73 : vector<16xf32> to vector<16x1xf32>
    %cst_18 = arith.constant 3.200000e+01 : f32
    %75 = vector.broadcast %cst_18 : f32 to vector<16x1xf32>
    %76 = arith.divf %74, %75 : vector<16x1xf32>
    %77 = vector.broadcast %69 : vector<16x1xf32> to vector<16x32xf32>
    %78 = arith.subf %63, %77 : vector<16x32xf32>
    %cst_19 = arith.constant 9.99999997E-7 : f32
    %79 = vector.broadcast %cst_19 : f32 to vector<16x1xf32>
    %80 = arith.addf %76, %79 : vector<16x1xf32>
    %81 = math.rsqrt %80 : vector<16x1xf32>
    %82 = vector.broadcast %81 : vector<16x1xf32> to vector<16x32xf32>
    %83 = arith.mulf %78, %82 : vector<16x32xf32>
    %84 = vector.broadcast %64 : vector<1x32xf32> to vector<16x32xf32>
    %85 = arith.mulf %83, %84 : vector<16x32xf32>
    %86 = vector.broadcast %65 : vector<1x32xf32> to vector<16x32xf32>
    %87 = arith.addf %85, %86 : vector<16x32xf32>
    %c0_20 = arith.constant 0 : index
    %c128 = arith.constant 128 : index
    %88 = vector.load %arg1[%c0_20, %c128] : memref<32x192xf32, #tpu.memory_space<vmem>>, vector<32x64xf32>
    %cst_21 = arith.constant dense<0.000000e+00> : vector<16x64xf32>
    %89 = tpu.matmul %87, %88, %cst_21 {dimension_numbers = #tpu.dot_dimension_numbers<[1], [0], [0], [1], [0, 0, 1, 1], [], []>} : vector<16x32xf32>, vector<32x64xf32>, vector<16x64xf32> -> vector<16x64xf32>
    %c2 = arith.constant 2 : index
    %c0_22 = arith.constant 0 : index
    %90 = vector.load %arg3[%c2, %c0_22] : memref<24x96xf32, #tpu.memory_space<vmem>>, vector<1x64xf32>
    %91 = vector.broadcast %90 : vector<1x64xf32> to vector<16x64xf32>
    %92 = arith.addf %89, %91 : vector<16x64xf32>
    %cst_23 = arith.constant 5.000000e-01 : f32
    %93 = vector.broadcast %cst_23 : f32 to vector<16x64xf32>
    %94 = arith.mulf %93, %92 : vector<16x64xf32>
    %95 = arith.mulf %92, %92 : vector<16x64xf32>
    %96 = arith.mulf %92, %95 : vector<16x64xf32>
    %cst_24 = arith.constant 4.471500e-02 : f32
    %97 = vector.broadcast %cst_24 : f32 to vector<16x64xf32>
    %98 = arith.mulf %97, %96 : vector<16x64xf32>
    %99 = arith.addf %92, %98 : vector<16x64xf32>
    %cst_25 = arith.constant 0.797884583 : f32
    %100 = vector.broadcast %cst_25 : f32 to vector<16x64xf32>
    %101 = arith.mulf %100, %99 : vector<16x64xf32>
    %102 = math.tanh %101 : vector<16x64xf32>
    %cst_26 = arith.constant 1.000000e+00 : f32
    %103 = vector.broadcast %cst_26 : f32 to vector<16x64xf32>
    %104 = arith.addf %103, %102 : vector<16x64xf32>
    %105 = arith.mulf %94, %104 : vector<16x64xf32>
    %c0_27 = arith.constant 0 : index
    %c0_28 = arith.constant 0 : index
    %106 = vector.load %arg2[%c0_27, %c0_28] : memref<64x32xf32, #tpu.memory_space<vmem>>, vector<64x32xf32>
    %cst_29 = arith.constant dense<0.000000e+00> : vector<16x32xf32>
    %107 = tpu.matmul %105, %106, %cst_29 {dimension_numbers = #tpu.dot_dimension_numbers<[1], [0], [0], [1], [0, 0, 1, 1], [], []>} : vector<16x64xf32>, vector<64x32xf32>, vector<16x32xf32> -> vector<16x32xf32>
    %c3 = arith.constant 3 : index
    %c0_30 = arith.constant 0 : index
    %108 = vector.load %arg3[%c3, %c0_30] : memref<24x96xf32, #tpu.memory_space<vmem>>, vector<1x32xf32>
    %109 = vector.broadcast %108 : vector<1x32xf32> to vector<16x32xf32>
    %110 = arith.addf %107, %109 : vector<16x32xf32>
    %111 = arith.addf %110, %63 : vector<16x32xf32>
    %112 = vector.extract_strided_slice %111 {offsets = [0, 0], sizes = [4, 32], strides = [1, 1]} : vector<16x32xf32> to vector<4x32xf32>
    %113 = vector.extract_strided_slice %111 {offsets = [4, 0], sizes = [4, 32], strides = [1, 1]} : vector<16x32xf32> to vector<4x32xf32>
    %114 = vector.extract_strided_slice %111 {offsets = [8, 0], sizes = [4, 32], strides = [1, 1]} : vector<16x32xf32> to vector<4x32xf32>
    %115 = vector.extract_strided_slice %111 {offsets = [12, 0], sizes = [4, 32], strides = [1, 1]} : vector<16x32xf32> to vector<4x32xf32>
    %116 = tpu.concatenate %112, %113, %114, %115 in 1 : vector<4x32xf32>, vector<4x32xf32>, vector<4x32xf32>, vector<4x32xf32> -> vector<4x128xf32>
    %c0_31 = arith.constant 0 : index
    %c0_32 = arith.constant 0 : index
    %117 = vector.load %arg4[%c0_31, %c0_32] : memref<4x128xf32, #tpu.memory_space<vmem>>, vector<4x128xf32>
    tpu.vector_store %arg4[%c0_31, %c0_32], %116 {strides = array<i32>} : memref<4x128xf32, #tpu.memory_space<vmem>>, vector<4x128xf32>,
    return
  }
}

</mosaic_0001>

<llo_original>
// kernel: tpu_custom_call.1
$region0: #{tpu_custom_call.1}
  #allocation0 [shape = 'u32[]', space=smem, size = 0x4, offset = 0x4, fixed_abs, tag = 'smem constant byte address 0x4 - core index']
  #allocation1 [shape = 'u32[144,128]{1,0:T(1,128)}', space=vmem, size = 0x12000, scoped, tag = 'internal scratch']
  %s0 = inlined_call_operand.hbm [shape: f32[16,32], index: 0, kind: input, shape index: {}]
  %s1 = inlined_call_operand.vmem [shape: f32[32,192], index: 1, kind: input, shape index: {}]
  %s2 = inlined_call_operand.vmem [shape: f32[64,32], index: 2, kind: input, shape index: {}]
  %s3 = inlined_call_operand.vmem [shape: f32[24,96], index: 3, kind: input, shape index: {}]
  %s4 = inlined_call_operand.hbm [shape: f32[4,128], index: 4, kind: output, shape index: {}]
  %s5 = sld [smem:[#allocation0]]
  $region30: #{tpu_custom_call.1} parent=0
    _
  %s7 = ssub.s32 1, %s5
  %s8 = scalar_select 0, %s7, %s5
  $region1: #{tpu_custom_call.1} parent=0
    #allocation2 [shape = 'u8[8192]{0}', space=vmem, size = 0x2000, scoped, tag = 'input window, operand 0, single buffered']
    #allocation3 [shape = 's32[1]{0}', space=sflag, size = 0x4, scoped, tag = 'scoped memory for tpu_custom_call.1']
    #allocation4 [shape = 's32[1]{0}', space=sflag, size = 0x4, scoped, tag = 'scoped memory for tpu_custom_call.1']
    #allocation5 [shape = 'u8[2048]{0}', space=vmem, size = 0x800, scoped, tag = 'output window, operand 0, single buffered']
    %9 = vsyncpa [#allocation3], 0
    %10 = vsyncpa [#allocation4], 0
    // Predicated region
    $region2: #{tpu_custom_call.1} parent=1 // pred_check
      _
    $region3: #{tpu_custom_call.1} parent=1 // pred_check_branch
      %12 = sbr.rel (0) target = $region5
    $region4: #{tpu_custom_call.1} parent=1 // pred_region
      %s14 = ssub.s32 256, 256
      %15 = vsyncadd [#allocation3], %s14
      %s16 = sshll.u32 [#allocation2], 4
      %s17 = int_to_ptr.vmem [resolvable:$true] %s16
      %22 = dma.hbm_to_vmem [thread:$0]  %s0, 256, %s17, [#allocation3], 128, 128, 8
    $region5: #{tpu_custom_call.1} parent=1 // pred_fallthru
      _
    // Predicated region
    $region6: #{tpu_custom_call.1} parent=1 // pred_check
      _
    $region7: #{tpu_custom_call.1} parent=1 // pred_check_branch
      %24 = sbr.rel (0) target = $region9
    $region8: #{tpu_custom_call.1} parent=1 // pred_region
      _
    $region9: #{tpu_custom_call.1} parent=1 // pred_fallthru
      _
    // Predicated region
    $region10: #{tpu_custom_call.1} parent=1 // pred_check
      _
    $region11: #{tpu_custom_call.1} parent=1 // pred_check_branch
      %26 = sbr.rel (0) target = $region13
    $region12: #{tpu_custom_call.1} parent=1 // pred_region
      _
    $region13: #{tpu_custom_call.1} parent=1 // pred_fallthru
      _
    // Predicated region
    $region14: #{tpu_custom_call.1} parent=1 // pred_check
      _
    $region15: #{tpu_custom_call.1} parent=1 // pred_check_branch
      %28 = sbr.rel (0) target = $region17
    $region16: #{tpu_custom_call.1} parent=1 // pred_region
      _
    $region17: #{tpu_custom_call.1} parent=1 // pred_fallthru
      _
    // Predicated region
    $region18: #{tpu_custom_call.1} parent=1 // pred_check
      _
    $region19: #{tpu_custom_call.1} parent=1 // pred_check_branch
      %30 = sbr.rel (0) target = $region21
    $region20: #{tpu_custom_call.1} parent=1 // pred_region
      %31 = dma.done [#allocation3], 256
    $region21: #{tpu_custom_call.1} parent=1 // pred_fallthru
      _
    %v32 = vld [vmem:[#allocation2] sm:$0xff]
    %v33 = vld [vmem:[#allocation2 + $0x8] sm:$0xff]
    %v34 = vld [vmem:[%s1] sm:$0xff]
    %v35 = vld [vmem:[%s1 + $0x10] sm:$0xff]
    %v36 = vld [vmem:[%s1 + $0x20] sm:$0xff]
    %v37 = vld [vmem:[%s1 + $0x30] sm:$0xff]
    %v38 = vld [vmem:[%s3] sm:$0x1]
    %v39 = vlaneseq
    %v40 = vshrl.u32 %v39, 7
    %v41 = vsub.s32 0, %v40
    %v42 = vrot.slane %v38, %v41
    %vm43 = vcmask 261120
    %v45 = vsel %vm43, %v32, 0
    %v48 = vsel %vm43, %v33, 0
    %50 = vmatprep.subr.mxu0 0.0
    %51 = vmatpush1.msra.mxu0 0.0
    %52 = vmatprep.subr.mxu0 0.0
    %53 = vmatpush1.msra.mxu0 0.0
    %54 = vmatprep.subr.mxu0 0.0
    %55 = vmatpush1.msra.mxu0 0.0
    %56 = vmatprep.subr.mxu0 0.0
    %57 = vmatpush1.msra.mxu0 0.0
    %58 = vmatprep.subr.mxu0 0.0
    %59 = vmatpush1.msra.mxu0 0.0
    %60 = vmatprep.subr.mxu0 0.0
    %61 = vmatpush1.msra.mxu0 0.0
    %62 = vmatprep.subr.mxu0 0.0
    %63 = vmatpush1.msra.mxu0 0.0
    %64 = vmatprep.subr.mxu0 0.0
    %65 = vmatpush1.msra.mxu0 0.0
    %66 = vmatprep.subr.mxu0 0.0
    %67 = vmatpush1.msra.mxu0 0.0
    %68 = vmatprep.subr.mxu0 0.0
    %69 = vmatpush1.msra.mxu0 0.0
    %70 = vmatprep.subr.mxu0 0.0
    %71 = vmatpush1.msra.mxu0 0.0
    %72 = vmatprep.subr.mxu0 0.0
    %73 = vmatpush1.msra.mxu0 0.0
    %74 = vmatprep.subr.mxu0 0.0
    %75 = vmatpush1.msra.mxu0 %v37
    %76 = vmatprep.subr.mxu0 0.0
    %77 = vmatpush1.msra.mxu0 %v36
    %78 = vmatprep.subr.mxu0 0.0
    %79 = vmatpush1.msra.mxu0 %v35
    %80 = vmatprep.subr.mxu0 0.0
    %81 = vmatpush1.msra.mxu0 %v34
    %82 = vmatprep.subr.mxu0 0.0
    %83 = vmatpush2.msra.mxu0 0.0
    %84 = vmatprep.subr.mxu0 0.0
    %85 = vmatpush2.msra.mxu0 0.0
    %86 = vmatprep.subr.mxu0 0.0
    %87 = vmatpush2.msra.mxu0 0.0
    %88 = vmatprep.subr.mxu0 0.0
    %89 = vmatpush2.msra.mxu0 0.0
    %90 = vmatprep.subr.mxu0 0.0
    %91 = vmatpush2.msra.mxu0 0.0
    %92 = vmatprep.subr.mxu0 0.0
    %93 = vmatpush2.msra.mxu0 0.0
    %94 = vmatprep.subr.mxu0 0.0
    %95 = vmatpush2.msra.mxu0 0.0
    %96 = vmatprep.subr.mxu0 0.0
    %97 = vmatpush2.msra.mxu0 0.0
    %98 = vmatprep.subr.mxu0 0.0
    %99 = vmatpush2.msra.mxu0 0.0
    %100 = vmatprep.subr.mxu0 0.0
    %101 = vmatpush2.msra.mxu0 0.0
    %102 = vmatprep.subr.mxu0 0.0
    %103 = vmatpush2.msra.mxu0 0.0
    %104 = vmatprep.subr.mxu0 0.0
    %105 = vmatpush2.msra.mxu0 0.0
    %106 = vmatprep.subr.mxu0 0.0
    %107 = vmatpush2.msra.mxu0 0.0
    %108 = vmatprep.subr.mxu0 0.0
    %109 = vmatpush2.msra.mxu0 0.0
    %110 = vmatprep.subr.mxu0 0.0
    %111 = vmatpush2.msra.mxu0 0.0
    %112 = vmatprep.subr.mxu0 0.0
    %113 = vmatpush2.msra.mxu0 0.0
    %114 = vmatprep.mubr.f32.mxu0 0.0
    %115 = vmatmul.mubr.f32.gmra.mxu0 %v45
    %v116 = vpop.f32.mrf.mxu0
    %v117 = vadd.f32 %v42, %v116
    %v118 = vpop.f32.mrf.mxu0
    %119 = vmatprep.mubr.f32.mxu0 0.0
    %120 = vmatmul.mubr.f32.gmra.mxu0 %v48
    %v121 = vpop.f32.mrf.mxu0
    %v122 = vadd.f32 %v42, %v121
    %v123 = vpop.f32.mrf.mxu0
    %124 = vdwg.mxu0
    %127 = vrot.lane.b32.xlu0 %v117, 120
    %v128 = vpop.permute.xlu0 %127
    %129 = vrot.lane.b32.xlu0 %v122, 120
    %v130 = vpop.permute.xlu0 %129
    %131 = vrot.lane.b32.xlu0 %v117, 112
    %v132 = vpop.permute.xlu0 %131
    %133 = vrot.lane.b32.xlu0 %v122, 112
    %v134 = vpop.permute.xlu0 %133
    %135 = vrot.lane.b32.xlu0 %v117, 104
    %v136 = vpop.permute.xlu0 %135
    %137 = vrot.lane.b32.xlu0 %v122, 104
    %v138 = vpop.permute.xlu0 %137
    %v139 = vld [vmem:[%s3 + $0x8] sm:$0xff]
    %v140 = vld [vmem:[%s3 + $0x10] sm:$0xff]
    %141 = vrot.lane.b32.xlu0 %v117, 96
    %v142 = vpop.permute.xlu0 %141
    %143 = vrot.lane.b32.xlu0 %v122, 96
    %v144 = vpop.permute.xlu0 %143
    %vm145 = vcmask 64512
    %v146 = vsel %vm145, %v117, 0
    %v148 = vsel %vm145, %v122, 0
    %v150 = vsel %vm145, %v142, 0
    %v152 = vsel %vm145, %v144, 0
    %154 = vmatprep.subr.mxu0 0.0
    %155 = vmatpush1.xpose.msra.mxu0 0.0
    %156 = vmatprep.subr.mxu0 0.0
    %157 = vmatpush1.xpose.msra.mxu0 0.0
    %158 = vmatprep.subr.mxu0 0.0
    %159 = vmatpush1.xpose.msra.mxu0 0.0
    %160 = vmatprep.subr.mxu0 0.0
    %161 = vmatpush1.xpose.msra.mxu0 0.0
    %162 = vmatprep.subr.mxu0 0.0
    %163 = vmatpush1.xpose.msra.mxu0 0.0
    %164 = vmatprep.subr.mxu0 0.0
    %165 = vmatpush1.xpose.msra.mxu0 0.0
    %166 = vmatprep.subr.mxu0 0.0
    %167 = vmatpush1.xpose.msra.mxu0 0.0
    %168 = vmatprep.subr.mxu0 0.0
    %169 = vmatpush1.xpose.msra.mxu0 0.0
    %170 = vmatprep.subr.mxu0 0.0
    %171 = vmatpush1.xpose.msra.mxu0 0.0
    %172 = vmatprep.subr.mxu0 0.0
    %173 = vmatpush1.xpose.msra.mxu0 0.0
    %174 = vmatprep.subr.mxu0 0.0
    %175 = vmatpush1.xpose.msra.mxu0 0.0
    %176 = vmatprep.subr.mxu0 0.0
    %177 = vmatpush1.xpose.msra.mxu0 0.0
    %178 = vmatprep.subr.mxu0 0.0
    %179 = vmatpush1.xpose.msra.mxu0 0.0
    %180 = vmatprep.subr.mxu0 0.0
    %181 = vmatpush1.xpose.msra.mxu0 0.0
    %182 = vmatprep.subr.mxu0 0.0
    %183 = vmatpush1.xpose.msra.mxu0 %v152
    %184 = vmatprep.subr.mxu0 0.0
    %185 = vmatpush1.xpose.msra.mxu0 %v150
    %186 = vmatprep.subr.mxu0 0.0
    %187 = vmatpush2.xpose.msra.mxu0 0.0
    %188 = vmatprep.subr.mxu0 0.0
    %189 = vmatpush2.xpose.msra.mxu0 0.0
    %190 = vmatprep.subr.mxu0 0.0
    %191 = vmatpush2.xpose.msra.mxu0 0.0
    %192 = vmatprep.subr.mxu0 0.0
    %193 = vmatpush2.xpose.msra.mxu0 0.0
    %194 = vmatprep.subr.mxu0 0.0
    %195 = vmatpush2.xpose.msra.mxu0 0.0
    %196 = vmatprep.subr.mxu0 0.0
    %197 = vmatpush2.xpose.msra.mxu0 0.0
    %198 = vmatprep.subr.mxu0 0.0
    %199 = vmatpush2.xpose.msra.mxu0 0.0
    %200 = vmatprep.subr.mxu0 0.0
    %201 = vmatpush2.xpose.msra.mxu0 0.0
    %202 = vmatprep.subr.mxu0 0.0
    %203 = vmatpush2.xpose.msra.mxu0 0.0
    %204 = vmatprep.subr.mxu0 0.0
    %205 = vmatpush2.xpose.msra.mxu0 0.0
    %206 = vmatprep.subr.mxu0 0.0
    %207 = vmatpush2.xpose.msra.mxu0 0.0
    %208 = vmatprep.subr.mxu0 0.0
    %209 = vmatpush2.xpose.msra.mxu0 0.0
    %210 = vmatprep.subr.mxu0 0.0
    %211 = vmatpush2.xpose.msra.mxu0 0.0
    %212 = vmatprep.subr.mxu0 0.0
    %213 = vmatpush2.xpose.msra.mxu0 0.0
    %214 = vmatprep.subr.mxu0 0.0
    %215 = vmatpush2.xpose.msra.mxu0 0.0
    %216 = vmatprep.subr.mxu0 0.0
    %217 = vmatpush2.xpose.msra.mxu0 0.0
    %218 = vmatprep.mubr.f32.mxu0 0.0
    %219 = vmatmul.mubr.f32.gmra.mxu0 %v146
    %v220 = vpop.f32.mrf.mxu0
    %v221 = vadd.f32 %v139, %v220
    %v222 = vpop.f32.mrf.mxu0
    %223 = vmatprep.mubr.f32.mxu0 0.0
    %224 = vmatmul.mubr.f32.gmra.mxu0 %v148
    %v225 = vpop.f32.mrf.mxu0
    %v226 = vadd.f32 %v140, %v225
    %v227 = vpop.f32.mrf.mxu0
    %228 = vdwg.mxu0
    %229 = vrot.lane.b32.xlu0 %v128, 96
    %v230 = vpop.permute.xlu0 %229
    %231 = vrot.lane.b32.xlu0 %v130, 96
    %v232 = vpop.permute.xlu0 %231
    %v233 = vsel %vm145, %v128, 0
    %v235 = vsel %vm145, %v130, 0
    %v237 = vsel %vm145, %v230, 0
    %v239 = vsel %vm145, %v232, 0
    %241 = vmatprep.subr.mxu0 0.0
    %242 = vmatpush1.xpose.msra.mxu0 0.0
    %243 = vmatprep.subr.mxu0 0.0
    %244 = vmatpush1.xpose.msra.mxu0 0.0
    %245 = vmatprep.subr.mxu0 0.0
    %246 = vmatpush1.xpose.msra.mxu0 0.0
    %247 = vmatprep.subr.mxu0 0.0
    %248 = vmatpush1.xpose.msra.mxu0 0.0
    %249 = vmatprep.subr.mxu0 0.0
    %250 = vmatpush1.xpose.msra.mxu0 0.0
    %251 = vmatprep.subr.mxu0 0.0
    %252 = vmatpush1.xpose.msra.mxu0 0.0
    %253 = vmatprep.subr.mxu0 0.0
    %254 = vmatpush1.xpose.msra.mxu0 0.0
    %255 = vmatprep.subr.mxu0 0.0
    %256 = vmatpush1.xpose.msra.mxu0 0.0
    %257 = vmatprep.subr.mxu0 0.0
    %258 = vmatpush1.xpose.msra.mxu0 0.0
    %259 = vmatprep.subr.mxu0 0.0
    %260 = vmatpush1.xpose.msra.mxu0 0.0
    %261 = vmatprep.subr.mxu0 0.0
    %262 = vmatpush1.xpose.msra.mxu0 0.0
    %263 = vmatprep.subr.mxu0 0.0
    %264 = vmatpush1.xpose.msra.mxu0 0.0
    %265 = vmatprep.subr.mxu0 0.0
    %266 = vmatpush1.xpose.msra.mxu0 0.0
    %267 = vmatprep.subr.mxu0 0.0
    %268 = vmatpush1.xpose.msra.mxu0 0.0
    %269 = vmatprep.subr.mxu0 0.0
    %270 = vmatpush1.xpose.msra.mxu0 %v239
    %271 = vmatprep.subr.mxu0 0.0
    %272 = vmatpush1.xpose.msra.mxu0 %v237
    %273 = vmatprep.subr.mxu0 0.0
    %274 = vmatpush2.xpose.msra.mxu0 0.0
    %275 = vmatprep.subr.mxu0 0.0
    %276 = vmatpush2.xpose.msra.mxu0 0.0
    %277 = vmatprep.subr.mxu0 0.0
    %278 = vmatpush2.xpose.msra.mxu0 0.0
    %279 = vmatprep.subr.mxu0 0.0
    %280 = vmatpush2.xpose.msra.mxu0 0.0
    %281 = vmatprep.subr.mxu0 0.0
    %282 = vmatpush2.xpose.msra.mxu0 0.0
    %283 = vmatprep.subr.mxu0 0.0
    %284 = vmatpush2.xpose.msra.mxu0 0.0
    %285 = vmatprep.subr.mxu0 0.0
    %286 = vmatpush2.xpose.msra.mxu0 0.0
    %287 = vmatprep.subr.mxu0 0.0
    %288 = vmatpush2.xpose.msra.mxu0 0.0
    %289 = vmatprep.subr.mxu0 0.0
    %290 = vmatpush2.xpose.msra.mxu0 0.0
    %291 = vmatprep.subr.mxu0 0.0
    %292 = vmatpush2.xpose.msra.mxu0 0.0
    %293 = vmatprep.subr.mxu0 0.0
    %294 = vmatpush2.xpose.msra.mxu0 0.0
    %295 = vmatprep.subr.mxu0 0.0
    %296 = vmatpush2.xpose.msra.mxu0 0.0
    %297 = vmatprep.subr.mxu0 0.0
    %298 = vmatpush2.xpose.msra.mxu0 0.0
    %299 = vmatprep.subr.mxu0 0.0
    %300 = vmatpush2.xpose.msra.mxu0 0.0
    %301 = vmatprep.subr.mxu0 0.0
    %302 = vmatpush2.xpose.msra.mxu0 0.0
    %303 = vmatprep.subr.mxu0 0.0
    %304 = vmatpush2.xpose.msra.mxu0 0.0
    %305 = vmatprep.mubr.f32.mxu0 0.0
    %306 = vmatmul.mubr.f32.gmra.mxu0 %v233
    %v307 = vpop.f32.mrf.mxu0
    %v308 = vadd.f32 %v139, %v307
    %v309 = vpop.f32.mrf.mxu0
    %310 = vmatprep.mubr.f32.mxu0 0.0
    %311 = vmatmul.mubr.f32.gmra.mxu0 %v235
    %v312 = vpop.f32.mrf.mxu0
    %v313 = vadd.f32 %v140, %v312
    %v314 = vpop.f32.mrf.mxu0
    %315 = vdwg.mxu0
    %316 = vrot.lane.b32.xlu0 %v132, 96
    %v317 = vpop.permute.xlu0 %316
    %318 = vrot.lane.b32.xlu0 %v134, 96
    %v319 = vpop.permute.xlu0 %318
    %v320 = vsel %vm145, %v132, 0
    %v322 = vsel %vm145, %v134, 0
    %v324 = vsel %vm145, %v317, 0
    %v326 = vsel %vm145, %v319, 0
    %328 = vmatprep.subr.mxu0 0.0
    %329 = vmatpush1.xpose.msra.mxu0 0.0
    %330 = vmatprep.subr.mxu0 0.0
    %331 = vmatpush1.xpose.msra.mxu0 0.0
    %332 = vmatprep.subr.mxu0 0.0
    %333 = vmatpush1.xpose.msra.mxu0 0.0
    %334 = vmatprep.subr.mxu0 0.0
    %335 = vmatpush1.xpose.msra.mxu0 0.0
    %336 = vmatprep.subr.mxu0 0.0
    %337 = vmatpush1.xpose.msra.mxu0 0.0
    %338 = vmatprep.subr.mxu0 0.0
    %339 = vmatpush1.xpose.msra.mxu0 0.0
    %340 = vmatprep.subr.mxu0 0.0
    %341 = vmatpush1.xpose.msra.mxu0 0.0
    %342 = vmatprep.subr.mxu0 0.0
    %343 = vmatpush1.xpose.msra.mxu0 0.0
    %344 = vmatprep.subr.mxu0 0.0
    %345 = vmatpush1.xpose.msra.mxu0 0.0
    %346 = vmatprep.subr.mxu0 0.0
    %347 = vmatpush1.xpose.msra.mxu0 0.0
    %348 = vmatprep.subr.mxu0 0.0
    %349 = vmatpush1.xpose.msra.mxu0 0.0
    %350 = vmatprep.subr.mxu0 0.0
    %351 = vmatpush1.xpose.msra.mxu0 0.0
    %352 = vmatprep.subr.mxu0 0.0
    %353 = vmatpush1.xpose.msra.mxu0 0.0
    %354 = vmatprep.subr.mxu0 0.0
    %355 = vmatpush1.xpose.msra.mxu0 0.0
    %356 = vmatprep.subr.mxu0 0.0
    %357 = vmatpush1.xpose.msra.mxu0 %v326
    %358 = vmatprep.subr.mxu0 0.0
    %359 = vmatpush1.xpose.msra.mxu0 %v324
    %360 = vmatprep.subr.mxu0 0.0
    %361 = vmatpush2.xpose.msra.mxu0 0.0
    %362 = vmatprep.subr.mxu0 0.0
    %363 = vmatpush2.xpose.msra.mxu0 0.0
    %364 = vmatprep.subr.mxu0 0.0
    %365 = vmatpush2.xpose.msra.mxu0 0.0
    %366 = vmatprep.subr.mxu0 0.0
    %367 = vmatpush2.xpose.msra.mxu0 0.0
    %368 = vmatprep.subr.mxu0 0.0
    %369 = vmatpush2.xpose.msra.mxu0 0.0
    %370 = vmatprep.subr.mxu0 0.0
    %371 = vmatpush2.xpose.msra.mxu0 0.0
    %372 = vmatprep.subr.mxu0 0.0
    %373 = vmatpush2.xpose.msra.mxu0 0.0
    %374 = vmatprep.subr.mxu0 0.0
    %375 = vmatpush2.xpose.msra.mxu0 0.0
    %376 = vmatprep.subr.mxu0 0.0
    %377 = vmatpush2.xpose.msra.mxu0 0.0
    %378 = vmatprep.subr.mxu0 0.0
    %379 = vmatpush2.xpose.msra.mxu0 0.0
    %380 = vmatprep.subr.mxu0 0.0
    %381 = vmatpush2.xpose.msra.mxu0 0.0
    %382 = vmatprep.subr.mxu0 0.0
    %383 = vmatpush2.xpose.msra.mxu0 0.0
    %384 = vmatprep.subr.mxu0 0.0
    %385 = vmatpush2.xpose.msra.mxu0 0.0
    %386 = vmatprep.subr.mxu0 0.0
    %387 = vmatpush2.xpose.msra.mxu0 0.0
    %388 = vmatprep.subr.mxu0 0.0
    %389 = vmatpush2.xpose.msra.mxu0 0.0
    %390 = vmatprep.subr.mxu0 0.0
    %391 = vmatpush2.xpose.msra.mxu0 0.0
    %392 = vmatprep.mubr.f32.mxu0 0.0
    %393 = vmatmul.mubr.f32.gmra.mxu0 %v320
    %v394 = vpop.f32.mrf.mxu0
    %v395 = vadd.f32 %v139, %v394
    %v396 = vpop.f32.mrf.mxu0
    %397 = vmatprep.mubr.f32.mxu0 0.0
    %398 = vmatmul.mubr.f32.gmra.mxu0 %v322
    %v399 = vpop.f32.mrf.mxu0
    %v400 = vadd.f32 %v140, %v399
    %v401 = vpop.f32.mrf.mxu0
    %402 = vdwg.mxu0
    %403 = vrot.lane.b32.xlu0 %v136, 96
    %v404 = vpop.permute.xlu0 %403
    %405 = vrot.lane.b32.xlu0 %v138, 96
    %v406 = vpop.permute.xlu0 %405
    %v407 = vsel %vm145, %v136, 0
    %v409 = vsel %vm145, %v138, 0
    %v411 = vsel %vm145, %v404, 0
    %v413 = vsel %vm145, %v406, 0
    %415 = vmatprep.subr.mxu0 0.0
    %416 = vmatpush1.xpose.msra.mxu0 0.0
    %417 = vmatprep.subr.mxu0 0.0
    %418 = vmatpush1.xpose.msra.mxu0 0.0
    %419 = vmatprep.subr.mxu0 0.0
    %420 = vmatpush1.xpose.msra.mxu0 0.0
    %421 = vmatprep.subr.mxu0 0.0
    %422 = vmatpush1.xpose.msra.mxu0 0.0
    %423 = vmatprep.subr.mxu0 0.0
    %424 = vmatpush1.xpose.msra.mxu0 0.0
    %425 = vmatprep.subr.mxu0 0.0
    %426 = vmatpush1.xpose.msra.mxu0 0.0
    %427 = vmatprep.subr.mxu0 0.0
    %428 = vmatpush1.xpose.msra.mxu0 0.0
    %429 = vmatprep.subr.mxu0 0.0
    %430 = vmatpush1.xpose.msra.mxu0 0.0
    %431 = vmatprep.subr.mxu0 0.0
    %432 = vmatpush1.xpose.msra.mxu0 0.0
    %433 = vmatprep.subr.mxu0 0.0
    %434 = vmatpush1.xpose.msra.mxu0 0.0
    %435 = vmatprep.subr.mxu0 0.0
    %436 = vmatpush1.xpose.msra.mxu0 0.0
    %437 = vmatprep.subr.mxu0 0.0
    %438 = vmatpush1.xpose.msra.mxu0 0.0
    %439 = vmatprep.subr.mxu0 0.0
    %440 = vmatpush1.xpose.msra.mxu0 0.0
    %441 = vmatprep.subr.mxu0 0.0
    %442 = vmatpush1.xpose.msra.mxu0 0.0
    %443 = vmatprep.subr.mxu0 0.0
    %444 = vmatpush1.xpose.msra.mxu0 %v413
    %445 = vmatprep.subr.mxu0 0.0
    %446 = vmatpush1.xpose.msra.mxu0 %v411
    %447 = vmatprep.subr.mxu0 0.0
    %448 = vmatpush2.xpose.msra.mxu0 0.0
    %449 = vmatprep.subr.mxu0 0.0
    %450 = vmatpush2.xpose.msra.mxu0 0.0
    %451 = vmatprep.subr.mxu0 0.0
    %452 = vmatpush2.xpose.msra.mxu0 0.0
    %453 = vmatprep.subr.mxu0 0.0
    %454 = vmatpush2.xpose.msra.mxu0 0.0
    %455 = vmatprep.subr.mxu0 0.0
    %456 = vmatpush2.xpose.msra.mxu0 0.0
    %457 = vmatprep.subr.mxu0 0.0
    %458 = vmatpush2.xpose.msra.mxu0 0.0
    %459 = vmatprep.subr.mxu0 0.0
    %460 = vmatpush2.xpose.msra.mxu0 0.0
    %461 = vmatprep.subr.mxu0 0.0
    %462 = vmatpush2.xpose.msra.mxu0 0.0
    %463 = vmatprep.subr.mxu0 0.0
    %464 = vmatpush2.xpose.msra.mxu0 0.0
    %465 = vmatprep.subr.mxu0 0.0
    %466 = vmatpush2.xpose.msra.mxu0 0.0
    %467 = vmatprep.subr.mxu0 0.0
    %468 = vmatpush2.xpose.msra.mxu0 0.0
    %469 = vmatprep.subr.mxu0 0.0
    %470 = vmatpush2.xpose.msra.mxu0 0.0
    %471 = vmatprep.subr.mxu0 0.0
    %472 = vmatpush2.xpose.msra.mxu0 0.0
    %473 = vmatprep.subr.mxu0 0.0
    %474 = vmatpush2.xpose.msra.mxu0 0.0
    %475 = vmatprep.subr.mxu0 0.0
    %476 = vmatpush2.xpose.msra.mxu0 0.0
    %477 = vmatprep.subr.mxu0 0.0
    %478 = vmatpush2.xpose.msra.mxu0 0.0
    %479 = vmatprep.mubr.f32.mxu0 0.0
    %480 = vmatmul.mubr.f32.gmra.mxu0 %v407
    %v481 = vpop.f32.mrf.mxu0
    %v482 = vadd.f32 %v139, %v481
    %v483 = vpop.f32.mrf.mxu0
    %484 = vmatprep.mubr.f32.mxu0 0.0
    %485 = vmatmul.mubr.f32.gmra.mxu0 %v409
    %v486 = vpop.f32.mrf.mxu0
    %v487 = vadd.f32 %v140, %v486
    %v488 = vpop.f32.mrf.mxu0
    %489 = vdwg.mxu0
    %vm490 = vcmask 130048
    %v491 = vsel %vm490, %v221, -inf
    %492 = vmax.xlane.f32.xlu0 %v491
    %v493 = vpop.xlane.xlu0 %492
    %v494 = vsel %vm490, %v226, -inf
    %495 = vmax.xlane.f32.xlu0 %v494
    %v496 = vpop.xlane.xlu0 %495
    %v497 = vsel %vm490, %v308, -inf
    %498 = vmax.xlane.f32.xlu0 %v497
    %v499 = vpop.xlane.xlu0 %498
    %v500 = vsel %vm490, %v313, -inf
    %501 = vmax.xlane.f32.xlu0 %v500
    %v502 = vpop.xlane.xlu0 %501
    %v503 = vsel %vm490, %v395, -inf
    %504 = vmax.xlane.f32.xlu0 %v503
    %v505 = vpop.xlane.xlu0 %504
    %v506 = vsel %vm490, %v400, -inf
    %507 = vmax.xlane.f32.xlu0 %v506
    %v508 = vpop.xlane.xlu0 %507
    %v509 = vsel %vm490, %v482, -inf
    %510 = vmax.xlane.f32.xlu0 %v509
    %v511 = vpop.xlane.xlu0 %510
    %v512 = vsel %vm490, %v487, -inf
    %513 = vmax.xlane.f32.xlu0 %v512
    %v514 = vpop.xlane.xlu0 %513
    %v515 = vsub.f32 %v221, %v493
    %v516 = vsub.f32 %v226, %v496
    %v517 = vsub.f32 %v308, %v499
    %v518 = vsub.f32 %v313, %v502
    %v519 = vsub.f32 %v395, %v505
    %v520 = vsub.f32 %v400, %v508
    %v521 = vsub.f32 %v482, %v511
    %v522 = vsub.f32 %v487, %v514
    %v523 = vmul.f32 %v515, 1.442695
    %v524 = vpow.pop %v523
    %v525 = vmul.f32 %v516, 1.442695
    %v526 = vpow.pop %v525
    %v527 = vmul.f32 %v517, 1.442695
    %v528 = vpow.pop %v527
    %v529 = vmul.f32 %v518, 1.442695
    %v530 = vpow.pop %v529
    %v531 = vmul.f32 %v519, 1.442695
    %v532 = vpow.pop %v531
    %v533 = vmul.f32 %v520, 1.442695
    %v534 = vpow.pop %v533
    %v535 = vmul.f32 %v521, 1.442695
    %v536 = vpow.pop %v535
    %v537 = vmul.f32 %v522, 1.442695
    %v538 = vpow.pop %v537
    %v539 = vsel %vm490, %v524, 0.0
    %540 = vadd.xlane.f32.xlu0 %v539
    %v541 = vpop.xlane.xlu0 %540
    %v542 = vsel %vm490, %v526, 0.0
    %543 = vadd.xlane.f32.xlu0 %v542
    %v544 = vpop.xlane.xlu0 %543
    %v545 = vsel %vm490, %v528, 0.0
    %546 = vadd.xlane.f32.xlu0 %v545
    %v547 = vpop.xlane.xlu0 %546
    %v548 = vsel %vm490, %v530, 0.0
    %549 = vadd.xlane.f32.xlu0 %v548
    %v550 = vpop.xlane.xlu0 %549
    %v551 = vsel %vm490, %v532, 0.0
    %552 = vadd.xlane.f32.xlu0 %v551
    %v553 = vpop.xlane.xlu0 %552
    %v554 = vsel %vm490, %v534, 0.0
    %555 = vadd.xlane.f32.xlu0 %v554
    %v556 = vpop.xlane.xlu0 %555
    %v557 = vsel %vm490, %v536, 0.0
    %558 = vadd.xlane.f32.xlu0 %v557
    %v559 = vpop.xlane.xlu0 %558
    %v560 = vsel %vm490, %v538, 0.0
    %561 = vadd.xlane.f32.xlu0 %v560
    %v562 = vpop.xlane.xlu0 %561
    %v563 = vrcp.pop %v541
    %v564 = vrcp.pop %v544
    %v565 = vrcp.pop %v547
    %v566 = vrcp.pop %v550
    %v567 = vrcp.pop %v553
    %v568 = vrcp.pop %v556
    %v569 = vrcp.pop %v559
    %v570 = vrcp.pop %v562
    %v571 = vmul.f32 %v524, %v563
    %v572 = vmul.f32 %v526, %v564
    %v573 = vmul.f32 %v528, %v565
    %v574 = vmul.f32 %v530, %v566
    %v575 = vmul.f32 %v532, %v567
    %v576 = vmul.f32 %v534, %v568
    %v577 = vmul.f32 %v536, %v569
    %v578 = vmul.f32 %v538, %v570
    %579 = vrot.lane.b32.xlu0 %v117, 64
    %v580 = vpop.permute.xlu0 %579
    %581 = vrot.lane.b32.xlu0 %v122, 64
    %v582 = vpop.permute.xlu0 %581
    %v586 = vsel %vm490, %v571, 0
    %v589 = vsel %vm490, %v572, 0
    %591 = vmatprep.subr.mxu0 0.0
    %592 = vmatpush1.msra.mxu0 0.0
    %593 = vmatprep.subr.mxu0 0.0
    %594 = vmatpush1.msra.mxu0 0.0
    %595 = vmatprep.subr.mxu0 0.0
    %596 = vmatpush1.msra.mxu0 0.0
    %597 = vmatprep.subr.mxu0 0.0
    %598 = vmatpush1.msra.mxu0 0.0
    %599 = vmatprep.subr.mxu0 0.0
    %600 = vmatpush1.msra.mxu0 0.0
    %601 = vmatprep.subr.mxu0 0.0
    %602 = vmatpush1.msra.mxu0 0.0
    %603 = vmatprep.subr.mxu0 0.0
    %604 = vmatpush1.msra.mxu0 0.0
    %605 = vmatprep.subr.mxu0 0.0
    %606 = vmatpush1.msra.mxu0 0.0
    %607 = vmatprep.subr.mxu0 0.0
    %608 = vmatpush1.msra.mxu0 0.0
    %609 = vmatprep.subr.mxu0 0.0
    %610 = vmatpush1.msra.mxu0 0.0
    %611 = vmatprep.subr.mxu0 0.0
    %612 = vmatpush1.msra.mxu0 0.0
    %613 = vmatprep.subr.mxu0 0.0
    %614 = vmatpush1.msra.mxu0 0.0
    %615 = vmatprep.subr.mxu0 0.0
    %616 = vmatpush1.msra.mxu0 0.0
    %617 = vmatprep.subr.mxu0 0.0
    %618 = vmatpush1.msra.mxu0 0.0
    %619 = vmatprep.subr.mxu0 0.0
    %620 = vmatpush1.msra.mxu0 %v582
    %621 = vmatprep.subr.mxu0 0.0
    %622 = vmatpush1.msra.mxu0 %v580
    %623 = vmatprep.subr.mxu0 0.0
    %624 = vmatpush2.msra.mxu0 0.0
    %625 = vmatprep.subr.mxu0 0.0
    %626 = vmatpush2.msra.mxu0 0.0
    %627 = vmatprep.subr.mxu0 0.0
    %628 = vmatpush2.msra.mxu0 0.0
    %629 = vmatprep.subr.mxu0 0.0
    %630 = vmatpush2.msra.mxu0 0.0
    %631 = vmatprep.subr.mxu0 0.0
    %632 = vmatpush2.msra.mxu0 0.0
    %633 = vmatprep.subr.mxu0 0.0
    %634 = vmatpush2.msra.mxu0 0.0
    %635 = vmatprep.subr.mxu0 0.0
    %636 = vmatpush2.msra.mxu0 0.0
    %637 = vmatprep.subr.mxu0 0.0
    %638 = vmatpush2.msra.mxu0 0.0
    %639 = vmatprep.subr.mxu0 0.0
    %640 = vmatpush2.msra.mxu0 0.0
    %641 = vmatprep.subr.mxu0 0.0
    %642 = vmatpush2.msra.mxu0 0.0
    %643 = vmatprep.subr.mxu0 0.0
    %644 = vmatpush2.msra.mxu0 0.0
    %645 = vmatprep.subr.mxu0 0.0
    %646 = vmatpush2.msra.mxu0 0.0
    %647 = vmatprep.subr.mxu0 0.0
    %648 = vmatpush2.msra.mxu0 0.0
    %649 = vmatprep.subr.mxu0 0.0
    %650 = vmatpush2.msra.mxu0 0.0
    %651 = vmatprep.subr.mxu0 0.0
    %652 = vmatpush2.msra.mxu0 0.0
    %653 = vmatprep.subr.mxu0 0.0
    %654 = vmatpush2.msra.mxu0 0.0
    %655 = vmatprep.mubr.f32.mxu0 0.0
    %656 = vmatmul.mubr.f32.gmra.mxu0 %v586
    %v657 = vpop.f32.mrf.mxu0
    %v658 = vadd.f32 0.0, %v657
    %v659 = vpop.f32.mrf.mxu0
    %660 = vmatprep.mubr.f32.mxu0 0.0
    %661 = vmatmul.mubr.f32.gmra.mxu0 %v589
    %v662 = vpop.f32.mrf.mxu0
    %v663 = vadd.f32 0.0, %v662
    %v664 = vpop.f32.mrf.mxu0
    %665 = vdwg.mxu0
    %666 = vrot.lane.b32.xlu0 %v128, 64
    %v667 = vpop.permute.xlu0 %666
    %668 = vrot.lane.b32.xlu0 %v130, 64
    %v669 = vpop.permute.xlu0 %668
    %v673 = vsel %vm490, %v573, 0
    %v676 = vsel %vm490, %v574, 0
    %678 = vmatprep.subr.mxu0 0.0
    %679 = vmatpush1.msra.mxu0 0.0
    %680 = vmatprep.subr.mxu0 0.0
    %681 = vmatpush1.msra.mxu0 0.0
    %682 = vmatprep.subr.mxu0 0.0
    %683 = vmatpush1.msra.mxu0 0.0
    %684 = vmatprep.subr.mxu0 0.0
    %685 = vmatpush1.msra.mxu0 0.0
    %686 = vmatprep.subr.mxu0 0.0
    %687 = vmatpush1.msra.mxu0 0.0
    %688 = vmatprep.subr.mxu0 0.0
    %689 = vmatpush1.msra.mxu0 0.0
    %690 = vmatprep.subr.mxu0 0.0
    %691 = vmatpush1.msra.mxu0 0.0
    %692 = vmatprep.subr.mxu0 0.0
    %693 = vmatpush1.msra.mxu0 0.0
    %694 = vmatprep.subr.mxu0 0.0
    %695 = vmatpush1.msra.mxu0 0.0
    %696 = vmatprep.subr.mxu0 0.0
    %697 = vmatpush1.msra.mxu0 0.0
    %698 = vmatprep.subr.mxu0 0.0
    %699 = vmatpush1.msra.mxu0 0.0
    %700 = vmatprep.subr.mxu0 0.0
    %701 = vmatpush1.msra.mxu0 0.0
    %702 = vmatprep.subr.mxu0 0.0
    %703 = vmatpush1.msra.mxu0 0.0
    %704 = vmatprep.subr.mxu0 0.0
    %705 = vmatpush1.msra.mxu0 0.0
    %706 = vmatprep.subr.mxu0 0.0
    %707 = vmatpush1.msra.mxu0 %v669
    %708 = vmatprep.subr.mxu0 0.0
    %709 = vmatpush1.msra.mxu0 %v667
    %710 = vmatprep.subr.mxu0 0.0
    %711 = vmatpush2.msra.mxu0 0.0
    %712 = vmatprep.subr.mxu0 0.0
    %713 = vmatpush2.msra.mxu0 0.0
    %714 = vmatprep.subr.mxu0 0.0
    %715 = vmatpush2.msra.mxu0 0.0
    %716 = vmatprep.subr.mxu0 0.0
    %717 = vmatpush2.msra.mxu0 0.0
    %718 = vmatprep.subr.mxu0 0.0
    %719 = vmatpush2.msra.mxu0 0.0
    %720 = vmatprep.subr.mxu0 0.0
    %721 = vmatpush2.msra.mxu0 0.0
    %722 = vmatprep.subr.mxu0 0.0
    %723 = vmatpush2.msra.mxu0 0.0
    %724 = vmatprep.subr.mxu0 0.0
    %725 = vmatpush2.msra.mxu0 0.0
    %726 = vmatprep.subr.mxu0 0.0
    %727 = vmatpush2.msra.mxu0 0.0
    %728 = vmatprep.subr.mxu0 0.0
    %729 = vmatpush2.msra.mxu0 0.0
    %730 = vmatprep.subr.mxu0 0.0
    %731 = vmatpush2.msra.mxu0 0.0
    %732 = vmatprep.subr.mxu0 0.0
    %733 = vmatpush2.msra.mxu0 0.0
    %734 = vmatprep.subr.mxu0 0.0
    %735 = vmatpush2.msra.mxu0 0.0
    %736 = vmatprep.subr.mxu0 0.0
    %737 = vmatpush2.msra.mxu0 0.0
    %738 = vmatprep.subr.mxu0 0.0
    %739 = vmatpush2.msra.mxu0 0.0
    %740 = vmatprep.subr.mxu0 0.0
    %741 = vmatpush2.msra.mxu0 0.0
    %742 = vmatprep.mubr.f32.mxu0 0.0
    %743 = vmatmul.mubr.f32.gmra.mxu0 %v673
    %v744 = vpop.f32.mrf.mxu0
    %v745 = vadd.f32 0.0, %v744
    %v746 = vpop.f32.mrf.mxu0
    %747 = vmatprep.mubr.f32.mxu0 0.0
    %748 = vmatmul.mubr.f32.gmra.mxu0 %v676
    %v749 = vpop.f32.mrf.mxu0
    %v750 = vadd.f32 0.0, %v749
    %v751 = vpop.f32.mrf.mxu0
    %752 = vdwg.mxu0
    %753 = vrot.lane.b32.xlu0 %v132, 64
    %v754 = vpop.permute.xlu0 %753
    %755 = vrot.lane.b32.xlu0 %v134, 64
    %v756 = vpop.permute.xlu0 %755
    %v760 = vsel %vm490, %v575, 0
    %v763 = vsel %vm490, %v576, 0
    %765 = vmatprep.subr.mxu0 0.0
    %766 = vmatpush1.msra.mxu0 0.0
    %767 = vmatprep.subr.mxu0 0.0
    %768 = vmatpush1.msra.mxu0 0.0
    %769 = vmatprep.subr.mxu0 0.0
    %770 = vmatpush1.msra.mxu0 0.0
    %771 = vmatprep.subr.mxu0 0.0
    %772 = vmatpush1.msra.mxu0 0.0
    %773 = vmatprep.subr.mxu0 0.0
    %774 = vmatpush1.msra.mxu0 0.0
    %775 = vmatprep.subr.mxu0 0.0
    %776 = vmatpush1.msra.mxu0 0.0
    %777 = vmatprep.subr.mxu0 0.0
    %778 = vmatpush1.msra.mxu0 0.0
    %779 = vmatprep.subr.mxu0 0.0
    %780 = vmatpush1.msra.mxu0 0.0
    %781 = vmatprep.subr.mxu0 0.0
    %782 = vmatpush1.msra.mxu0 0.0
    %783 = vmatprep.subr.mxu0 0.0
    %784 = vmatpush1.msra.mxu0 0.0
    %785 = vmatprep.subr.mxu0 0.0
    %786 = vmatpush1.msra.mxu0 0.0
    %787 = vmatprep.subr.mxu0 0.0
    %788 = vmatpush1.msra.mxu0 0.0
    %789 = vmatprep.subr.mxu0 0.0
    %790 = vmatpush1.msra.mxu0 0.0
    %791 = vmatprep.subr.mxu0 0.0
    %792 = vmatpush1.msra.mxu0 0.0
    %793 = vmatprep.subr.mxu0 0.0
    %794 = vmatpush1.msra.mxu0 %v756
    %795 = vmatprep.subr.mxu0 0.0
    %796 = vmatpush1.msra.mxu0 %v754
    %797 = vmatprep.subr.mxu0 0.0
    %798 = vmatpush2.msra.mxu0 0.0
    %799 = vmatprep.subr.mxu0 0.0
    %800 = vmatpush2.msra.mxu0 0.0
    %801 = vmatprep.subr.mxu0 0.0
    %802 = vmatpush2.msra.mxu0 0.0
    %803 = vmatprep.subr.mxu0 0.0
    %804 = vmatpush2.msra.mxu0 0.0
    %805 = vmatprep.subr.mxu0 0.0
    %806 = vmatpush2.msra.mxu0 0.0
    %807 = vmatprep.subr.mxu0 0.0
    %808 = vmatpush2.msra.mxu0 0.0
    %809 = vmatprep.subr.mxu0 0.0
    %810 = vmatpush2.msra.mxu0 0.0
    %811 = vmatprep.subr.mxu0 0.0
    %812 = vmatpush2.msra.mxu0 0.0
    %813 = vmatprep.subr.mxu0 0.0
    %814 = vmatpush2.msra.mxu0 0.0
    %815 = vmatprep.subr.mxu0 0.0
    %816 = vmatpush2.msra.mxu0 0.0
    %817 = vmatprep.subr.mxu0 0.0
    %818 = vmatpush2.msra.mxu0 0.0
    %819 = vmatprep.subr.mxu0 0.0
    %820 = vmatpush2.msra.mxu0 0.0
    %821 = vmatprep.subr.mxu0 0.0
    %822 = vmatpush2.msra.mxu0 0.0
    %823 = vmatprep.subr.mxu0 0.0
    %824 = vmatpush2.msra.mxu0 0.0
    %825 = vmatprep.subr.mxu0 0.0
    %826 = vmatpush2.msra.mxu0 0.0
    %827 = vmatprep.subr.mxu0 0.0
    %828 = vmatpush2.msra.mxu0 0.0
    %829 = vmatprep.mubr.f32.mxu0 0.0
    %830 = vmatmul.mubr.f32.gmra.mxu0 %v760
    %v831 = vpop.f32.mrf.mxu0
    %v832 = vadd.f32 0.0, %v831
    %v833 = vpop.f32.mrf.mxu0
    %834 = vmatprep.mubr.f32.mxu0 0.0
    %835 = vmatmul.mubr.f32.gmra.mxu0 %v763
    %v836 = vpop.f32.mrf.mxu0
    %v837 = vadd.f32 0.0, %v836
    %v838 = vpop.f32.mrf.mxu0
    %839 = vdwg.mxu0
    %840 = vrot.lane.b32.xlu0 %v136, 64
    %v841 = vpop.permute.xlu0 %840
    %842 = vrot.lane.b32.xlu0 %v138, 64
    %v843 = vpop.permute.xlu0 %842
    %v847 = vsel %vm490, %v577, 0
    %v850 = vsel %vm490, %v578, 0
    %852 = vmatprep.subr.mxu0 0.0
    %853 = vmatpush1.msra.mxu0 0.0
    %854 = vmatprep.subr.mxu0 0.0
    %855 = vmatpush1.msra.mxu0 0.0
    %856 = vmatprep.subr.mxu0 0.0
    %857 = vmatpush1.msra.mxu0 0.0
    %858 = vmatprep.subr.mxu0 0.0
    %859 = vmatpush1.msra.mxu0 0.0
    %860 = vmatprep.subr.mxu0 0.0
    %861 = vmatpush1.msra.mxu0 0.0
    %862 = vmatprep.subr.mxu0 0.0
    %863 = vmatpush1.msra.mxu0 0.0
    %864 = vmatprep.subr.mxu0 0.0
    %865 = vmatpush1.msra.mxu0 0.0
    %866 = vmatprep.subr.mxu0 0.0
    %867 = vmatpush1.msra.mxu0 0.0
    %868 = vmatprep.subr.mxu0 0.0
    %869 = vmatpush1.msra.mxu0 0.0
    %870 = vmatprep.subr.mxu0 0.0
    %871 = vmatpush1.msra.mxu0 0.0
    %872 = vmatprep.subr.mxu0 0.0
    %873 = vmatpush1.msra.mxu0 0.0
    %874 = vmatprep.subr.mxu0 0.0
    %875 = vmatpush1.msra.mxu0 0.0
    %876 = vmatprep.subr.mxu0 0.0
    %877 = vmatpush1.msra.mxu0 0.0
    %878 = vmatprep.subr.mxu0 0.0
    %879 = vmatpush1.msra.mxu0 0.0
    %880 = vmatprep.subr.mxu0 0.0
    %881 = vmatpush1.msra.mxu0 %v843
    %882 = vmatprep.subr.mxu0 0.0
    %883 = vmatpush1.msra.mxu0 %v841
    %884 = vmatprep.subr.mxu0 0.0
    %885 = vmatpush2.msra.mxu0 0.0
    %886 = vmatprep.subr.mxu0 0.0
    %887 = vmatpush2.msra.mxu0 0.0
    %888 = vmatprep.subr.mxu0 0.0
    %889 = vmatpush2.msra.mxu0 0.0
    %890 = vmatprep.subr.mxu0 0.0
    %891 = vmatpush2.msra.mxu0 0.0
    %892 = vmatprep.subr.mxu0 0.0
    %893 = vmatpush2.msra.mxu0 0.0
    %894 = vmatprep.subr.mxu0 0.0
    %895 = vmatpush2.msra.mxu0 0.0
    %896 = vmatprep.subr.mxu0 0.0
    %897 = vmatpush2.msra.mxu0 0.0
    %898 = vmatprep.subr.mxu0 0.0
    %899 = vmatpush2.msra.mxu0 0.0
    %900 = vmatprep.subr.mxu0 0.0
    %901 = vmatpush2.msra.mxu0 0.0
    %902 = vmatprep.subr.mxu0 0.0
    %903 = vmatpush2.msra.mxu0 0.0
    %904 = vmatprep.subr.mxu0 0.0
    %905 = vmatpush2.msra.mxu0 0.0
    %906 = vmatprep.subr.mxu0 0.0
    %907 = vmatpush2.msra.mxu0 0.0
    %908 = vmatprep.subr.mxu0 0.0
    %909 = vmatpush2.msra.mxu0 0.0
    %910 = vmatprep.subr.mxu0 0.0
    %911 = vmatpush2.msra.mxu0 0.0
    %912 = vmatprep.subr.mxu0 0.0
    %913 = vmatpush2.msra.mxu0 0.0
    %914 = vmatprep.subr.mxu0 0.0
    %915 = vmatpush2.msra.mxu0 0.0
    %916 = vmatprep.mubr.f32.mxu0 0.0
    %917 = vmatmul.mubr.f32.gmra.mxu0 %v847
    %v918 = vpop.f32.mrf.mxu0
    %v919 = vadd.f32 0.0, %v918
    %v920 = vpop.f32.mrf.mxu0
    %921 = vmatprep.mubr.f32.mxu0 0.0
    %922 = vmatmul.mubr.f32.gmra.mxu0 %v850
    %v923 = vpop.f32.mrf.mxu0
    %v924 = vadd.f32 0.0, %v923
    %v925 = vpop.f32.mrf.mxu0
    %926 = vdwg.mxu0
    %929 = vrot.lane.b32.xlu0 %v745, 8
    %v930 = vpop.permute.xlu0 %929
    %931 = vrot.lane.b32.xlu0 %v750, 8
    %v932 = vpop.permute.xlu0 %931
    %937 = vrot.lane.b32.xlu0 %v832, 16
    %v938 = vpop.permute.xlu0 %937
    %939 = vrot.lane.b32.xlu0 %v837, 16
    %v940 = vpop.permute.xlu0 %939
    %945 = vrot.lane.b32.xlu0 %v919, 24
    %v946 = vpop.permute.xlu0 %945
    %947 = vrot.lane.b32.xlu0 %v924, 24
    %v948 = vpop.permute.xlu0 %947
    %v951 = vsel %vm145, %v658, %v930
    %v952 = vsel %vm145, %v663, %v932
    %v953 = vsel %vm490, %v951, %v938
    %v954 = vsel %vm490, %v952, %v940
    %vm955 = vcmask 195584
    %v956 = vsel %vm955, %v953, %v946
    %v957 = vsel %vm955, %v954, %v948
    %v958 = vld [vmem:[%s3 + $0x1] sm:$0x1]
    %v959 = vlaneseq
    %v960 = vshrl.u32 %v959, 7
    %v961 = vsub.s32 0, %v960
    %v962 = vrot.slane %v958, %v961
    %967 = vrot.lane.b32.xlu0 %v34, 32
    %v968 = vpop.permute.xlu0 %967
    %969 = vrot.lane.b32.xlu0 %v35, 32
    %v970 = vpop.permute.xlu0 %969
    %971 = vrot.lane.b32.xlu0 %v36, 32
    %v972 = vpop.permute.xlu0 %971
    %973 = vrot.lane.b32.xlu0 %v37, 32
    %v974 = vpop.permute.xlu0 %973
    %v980 = vsel %vm43, %v956, 0
    %v983 = vsel %vm43, %v957, 0
    %985 = vmatprep.subr.mxu0 0.0
    %986 = vmatpush1.msra.mxu0 0.0
    %987 = vmatprep.subr.mxu0 0.0
    %988 = vmatpush1.msra.mxu0 0.0
    %989 = vmatprep.subr.mxu0 0.0
    %990 = vmatpush1.msra.mxu0 0.0
    %991 = vmatprep.subr.mxu0 0.0
    %992 = vmatpush1.msra.mxu0 0.0
    %993 = vmatprep.subr.mxu0 0.0
    %994 = vmatpush1.msra.mxu0 0.0
    %995 = vmatprep.subr.mxu0 0.0
    %996 = vmatpush1.msra.mxu0 0.0
    %997 = vmatprep.subr.mxu0 0.0
    %998 = vmatpush1.msra.mxu0 0.0
    %999 = vmatprep.subr.mxu0 0.0
    %1000 = vmatpush1.msra.mxu0 0.0
    %1001 = vmatprep.subr.mxu0 0.0
    %1002 = vmatpush1.msra.mxu0 0.0
    %1003 = vmatprep.subr.mxu0 0.0
    %1004 = vmatpush1.msra.mxu0 0.0
    %1005 = vmatprep.subr.mxu0 0.0
    %1006 = vmatpush1.msra.mxu0 0.0
    %1007 = vmatprep.subr.mxu0 0.0
    %1008 = vmatpush1.msra.mxu0 0.0
    %1009 = vmatprep.subr.mxu0 0.0
    %1010 = vmatpush1.msra.mxu0 %v974
    %1011 = vmatprep.subr.mxu0 0.0
    %1012 = vmatpush1.msra.mxu0 %v972
    %1013 = vmatprep.subr.mxu0 0.0
    %1014 = vmatpush1.msra.mxu0 %v970
    %1015 = vmatprep.subr.mxu0 0.0
    %1016 = vmatpush1.msra.mxu0 %v968
    %1017 = vmatprep.subr.mxu0 0.0
    %1018 = vmatpush2.msra.mxu0 0.0
    %1019 = vmatprep.subr.mxu0 0.0
    %1020 = vmatpush2.msra.mxu0 0.0
    %1021 = vmatprep.subr.mxu0 0.0
    %1022 = vmatpush2.msra.mxu0 0.0
    %1023 = vmatprep.subr.mxu0 0.0
    %1024 = vmatpush2.msra.mxu0 0.0
    %1025 = vmatprep.subr.mxu0 0.0
    %1026 = vmatpush2.msra.mxu0 0.0
    %1027 = vmatprep.subr.mxu0 0.0
    %1028 = vmatpush2.msra.mxu0 0.0
    %1029 = vmatprep.subr.mxu0 0.0
    %1030 = vmatpush2.msra.mxu0 0.0
    %1031 = vmatprep.subr.mxu0 0.0
    %1032 = vmatpush2.msra.mxu0 0.0
    %1033 = vmatprep.subr.mxu0 0.0
    %1034 = vmatpush2.msra.mxu0 0.0
    %1035 = vmatprep.subr.mxu0 0.0
    %1036 = vmatpush2.msra.mxu0 0.0
    %1037 = vmatprep.subr.mxu0 0.0
    %1038 = vmatpush2.msra.mxu0 0.0
    %1039 = vmatprep.subr.mxu0 0.0
    %1040 = vmatpush2.msra.mxu0 0.0
    %1041 = vmatprep.subr.mxu0 0.0
    %1042 = vmatpush2.msra.mxu0 0.0
    %1043 = vmatprep.subr.mxu0 0.0
    %1044 = vmatpush2.msra.mxu0 0.0
    %1045 = vmatprep.subr.mxu0 0.0
    %1046 = vmatpush2.msra.mxu0 0.0
    %1047 = vmatprep.subr.mxu0 0.0
    %1048 = vmatpush2.msra.mxu0 0.0
    %1049 = vmatprep.mubr.f32.mxu0 0.0
    %1050 = vmatmul.mubr.f32.gmra.mxu0 %v980
    %v1051 = vpop.f32.mrf.mxu0
    %v1052 = vadd.f32 %v962, %v1051
    %v1053 = vpop.f32.mrf.mxu0
    %1054 = vmatprep.mubr.f32.mxu0 0.0
    %1055 = vmatmul.mubr.f32.gmra.mxu0 %v983
    %v1056 = vpop.f32.mrf.mxu0
    %v1057 = vadd.f32 %v962, %v1056
    %v1058 = vpop.f32.mrf.mxu0
    %1059 = vdwg.mxu0
    %v1060 = vadd.f32 %v1052, %v32
    %v1061 = vadd.f32 %v1057, %v33
    %v1062 = vld [vmem:[%s3 + $0x6] sm:$0x1]
    %v1063 = vld [vmem:[%s3 + $0x7] sm:$0x1]
    %v1064 = vsel %vm43, %v1060, 0.0
    %1065 = vadd.xlane.f32.xlu0 %v1064
    %v1066 = vpop.xlane.xlu0 %1065
    %v1067 = vsel %vm43, %v1061, 0.0
    %1068 = vadd.xlane.f32.xlu0 %v1067
    %v1069 = vpop.xlane.xlu0 %1068
    %v1070 = vrcp.pop 32.0
    %v1071 = vmul.f32 %v1066, %v1070
    %v1072 = vmul.f32 %v1069, %v1070
    %v1073 = vsub.f32 %v1060, %v1071
    %v1074 = vsub.f32 %v1061, %v1072
    %v1075 = vmul.f32 %v1073, %v1073
    %v1076 = vmul.f32 %v1074, %v1074
    %v1077 = vsel %vm43, %v1075, 0.0
    %1078 = vadd.xlane.f32.xlu0 %v1077
    %v1079 = vpop.xlane.xlu0 %1078
    %v1080 = vsel %vm43, %v1076, 0.0
    %1081 = vadd.xlane.f32.xlu0 %v1080
    %v1082 = vpop.xlane.xlu0 %1081
    %v1083 = vmul.f32 %v1079, %v1070
    %v1084 = vmul.f32 %v1082, %v1070
    %v1085 = vadd.f32 %v1083, 1e-06
    %v1086 = vadd.f32 %v1084, 1e-06
    %v1087 = vrsqrt.pop %v1085
    %v1088 = vrsqrt.pop %v1086
    %v1089 = vmul.f32 %v1073, %v1087
    %v1090 = vmul.f32 %v1074, %v1088
    %v1091 = vlaneseq
    %v1092 = vshrl.u32 %v1091, 7
    %v1093 = vsub.s32 0, %v1092
    %v1094 = vrot.slane %v1062, %v1093
    %v1095 = vmul.f32 %v1089, %v1094
    %v1096 = vmul.f32 %v1090, %v1094
    %v1097 = vlaneseq
    %v1098 = vshrl.u32 %v1097, 7
    %v1099 = vsub.s32 0, %v1098
    %v1100 = vrot.slane %v1063, %v1099
    %v1101 = vadd.f32 %v1095, %v1100
    %v1102 = vadd.f32 %v1096, %v1100
    %v1103 = vld [vmem:[%s1 + $0x8] sm:$0xff]
    %v1104 = vld [vmem:[%s1 + $0x18] sm:$0xff]
    %v1105 = vld [vmem:[%s1 + $0x28] sm:$0xff]
    %v1106 = vld [vmem:[%s1 + $0x38] sm:$0xff]
    %v1107 = vld [vmem:[%s3 + $0x2] sm:$0x1]
    %v1108 = vlaneseq
    %v1109 = vshrl.u32 %v1108, 7
    %v1110 = vsub.s32 0, %v1109
    %v1111 = vrot.slane %v1107, %v1110
    %v1113 = vsel %vm43, %v1101, 0
    %v1116 = vsel %vm43, %v1102, 0
    %1118 = vmatprep.subr.mxu0 0.0
    %1119 = vmatpush1.msra.mxu0 0.0
    %1120 = vmatprep.subr.mxu0 0.0
    %1121 = vmatpush1.msra.mxu0 0.0
    %1122 = vmatprep.subr.mxu0 0.0
    %1123 = vmatpush1.msra.mxu0 0.0
    %1124 = vmatprep.subr.mxu0 0.0
    %1125 = vmatpush1.msra.mxu0 0.0
    %1126 = vmatprep.subr.mxu0 0.0
    %1127 = vmatpush1.msra.mxu0 0.0
    %1128 = vmatprep.subr.mxu0 0.0
    %1129 = vmatpush1.msra.mxu0 0.0
    %1130 = vmatprep.subr.mxu0 0.0
    %1131 = vmatpush1.msra.mxu0 0.0
    %1132 = vmatprep.subr.mxu0 0.0
    %1133 = vmatpush1.msra.mxu0 0.0
    %1134 = vmatprep.subr.mxu0 0.0
    %1135 = vmatpush1.msra.mxu0 0.0
    %1136 = vmatprep.subr.mxu0 0.0
    %1137 = vmatpush1.msra.mxu0 0.0
    %1138 = vmatprep.subr.mxu0 0.0
    %1139 = vmatpush1.msra.mxu0 0.0
    %1140 = vmatprep.subr.mxu0 0.0
    %1141 = vmatpush1.msra.mxu0 0.0
    %1142 = vmatprep.subr.mxu0 0.0
    %1143 = vmatpush1.msra.mxu0 %v1106
    %1144 = vmatprep.subr.mxu0 0.0
    %1145 = vmatpush1.msra.mxu0 %v1105
    %1146 = vmatprep.subr.mxu0 0.0
    %1147 = vmatpush1.msra.mxu0 %v1104
    %1148 = vmatprep.subr.mxu0 0.0
    %1149 = vmatpush1.msra.mxu0 %v1103
    %1150 = vmatprep.subr.mxu0 0.0
    %1151 = vmatpush2.msra.mxu0 0.0
    %1152 = vmatprep.subr.mxu0 0.0
    %1153 = vmatpush2.msra.mxu0 0.0
    %1154 = vmatprep.subr.mxu0 0.0
    %1155 = vmatpush2.msra.mxu0 0.0
    %1156 = vmatprep.subr.mxu0 0.0
    %1157 = vmatpush2.msra.mxu0 0.0
    %1158 = vmatprep.subr.mxu0 0.0
    %1159 = vmatpush2.msra.mxu0 0.0
    %1160 = vmatprep.subr.mxu0 0.0
    %1161 = vmatpush2.msra.mxu0 0.0
    %1162 = vmatprep.subr.mxu0 0.0
    %1163 = vmatpush2.msra.mxu0 0.0
    %1164 = vmatprep.subr.mxu0 0.0
    %1165 = vmatpush2.msra.mxu0 0.0
    %1166 = vmatprep.subr.mxu0 0.0
    %1167 = vmatpush2.msra.mxu0 0.0
    %1168 = vmatprep.subr.mxu0 0.0
    %1169 = vmatpush2.msra.mxu0 0.0
    %1170 = vmatprep.subr.mxu0 0.0
    %1171 = vmatpush2.msra.mxu0 0.0
    %1172 = vmatprep.subr.mxu0 0.0
    %1173 = vmatpush2.msra.mxu0 0.0
    %1174 = vmatprep.subr.mxu0 0.0
    %1175 = vmatpush2.msra.mxu0 0.0
    %1176 = vmatprep.subr.mxu0 0.0
    %1177 = vmatpush2.msra.mxu0 0.0
    %1178 = vmatprep.subr.mxu0 0.0
    %1179 = vmatpush2.msra.mxu0 0.0
    %1180 = vmatprep.subr.mxu0 0.0
    %1181 = vmatpush2.msra.mxu0 0.0
    %1182 = vmatprep.mubr.f32.mxu0 0.0
    %1183 = vmatmul.mubr.f32.gmra.mxu0 %v1113
    %v1184 = vpop.f32.mrf.mxu0
    %v1185 = vadd.f32 %v1111, %v1184
    %v1186 = vpop.f32.mrf.mxu0
    %1187 = vmatprep.mubr.f32.mxu0 0.0
    %1188 = vmatmul.mubr.f32.gmra.mxu0 %v1116
    %v1189 = vpop.f32.mrf.mxu0
    %v1190 = vadd.f32 %v1111, %v1189
    %v1191 = vpop.f32.mrf.mxu0
    %1192 = vdwg.mxu0
    %v1193 = vmul.f32 %v1185, 0.5
    %v1194 = vmul.f32 %v1190, 0.5
    %v1195 = vmul.f32 %v1185, %v1185
    %v1196 = vmul.f32 %v1190, %v1190
    %v1197 = vmul.f32 %v1185, %v1195
    %v1198 = vmul.f32 %v1190, %v1196
    %v1199 = vmul.f32 %v1197, 0.044715
    %v1200 = vmul.f32 %v1198, 0.044715
    %v1201 = vadd.f32 %v1185, %v1199
    %v1202 = vadd.f32 %v1190, %v1200
    %v1203 = vmul.f32 %v1201, 0.7978846
    %v1204 = vmul.f32 %v1202, 0.7978846
    %v1205 = vtanh.pop %v1203
    %v1206 = vtanh.pop %v1204
    %v1207 = vadd.f32 %v1205, 1.0
    %v1208 = vadd.f32 %v1206, 1.0
    %v1209 = vmul.f32 %v1193, %v1207
    %v1210 = vmul.f32 %v1194, %v1208
    %v1211 = vld [vmem:[%s2] sm:$0xff]
    %v1212 = vld [vmem:[%s2 + $0x8] sm:$0xff]
    %v1213 = vld [vmem:[%s2 + $0x10] sm:$0xff]
    %v1214 = vld [vmem:[%s2 + $0x18] sm:$0xff]
    %v1215 = vld [vmem:[%s2 + $0x20] sm:$0xff]
    %v1216 = vld [vmem:[%s2 + $0x28] sm:$0xff]
    %v1217 = vld [vmem:[%s2 + $0x30] sm:$0xff]
    %v1218 = vld [vmem:[%s2 + $0x38] sm:$0xff]
    %v1219 = vld [vmem:[%s3 + $0x3] sm:$0x1]
    %v1220 = vlaneseq
    %v1221 = vshrl.u32 %v1220, 7
    %v1222 = vsub.s32 0, %v1221
    %v1223 = vrot.slane %v1219, %v1222
    %vm1224 = vcmask 523264
    %v1226 = vsel %vm1224, %v1209, 0
    %v1229 = vsel %vm1224, %v1210, 0
    %1231 = vmatprep.subr.mxu0 0.0
    %1232 = vmatpush1.msra.mxu0 0.0
    %1233 = vmatprep.subr.mxu0 0.0
    %1234 = vmatpush1.msra.mxu0 0.0
    %1235 = vmatprep.subr.mxu0 0.0
    %1236 = vmatpush1.msra.mxu0 0.0
    %1237 = vmatprep.subr.mxu0 0.0
    %1238 = vmatpush1.msra.mxu0 0.0
    %1239 = vmatprep.subr.mxu0 0.0
    %1240 = vmatpush1.msra.mxu0 0.0
    %1241 = vmatprep.subr.mxu0 0.0
    %1242 = vmatpush1.msra.mxu0 0.0
    %1243 = vmatprep.subr.mxu0 0.0
    %1244 = vmatpush1.msra.mxu0 0.0
    %1245 = vmatprep.subr.mxu0 0.0
    %1246 = vmatpush1.msra.mxu0 0.0
    %1247 = vmatprep.subr.mxu0 0.0
    %1248 = vmatpush1.msra.mxu0 %v1218
    %1249 = vmatprep.subr.mxu0 0.0
    %1250 = vmatpush1.msra.mxu0 %v1217
    %1251 = vmatprep.subr.mxu0 0.0
    %1252 = vmatpush1.msra.mxu0 %v1216
    %1253 = vmatprep.subr.mxu0 0.0
    %1254 = vmatpush1.msra.mxu0 %v1215
    %1255 = vmatprep.subr.mxu0 0.0
    %1256 = vmatpush1.msra.mxu0 %v1214
    %1257 = vmatprep.subr.mxu0 0.0
    %1258 = vmatpush1.msra.mxu0 %v1213
    %1259 = vmatprep.subr.mxu0 0.0
    %1260 = vmatpush1.msra.mxu0 %v1212
    %1261 = vmatprep.subr.mxu0 0.0
    %1262 = vmatpush1.msra.mxu0 %v1211
    %1263 = vmatprep.subr.mxu0 0.0
    %1264 = vmatpush2.msra.mxu0 0.0
    %1265 = vmatprep.subr.mxu0 0.0
    %1266 = vmatpush2.msra.mxu0 0.0
    %1267 = vmatprep.subr.mxu0 0.0
    %1268 = vmatpush2.msra.mxu0 0.0
    %1269 = vmatprep.subr.mxu0 0.0
    %1270 = vmatpush2.msra.mxu0 0.0
    %1271 = vmatprep.subr.mxu0 0.0
    %1272 = vmatpush2.msra.mxu0 0.0
    %1273 = vmatprep.subr.mxu0 0.0
    %1274 = vmatpush2.msra.mxu0 0.0
    %1275 = vmatprep.subr.mxu0 0.0
    %1276 = vmatpush2.msra.mxu0 0.0
    %1277 = vmatprep.subr.mxu0 0.0
    %1278 = vmatpush2.msra.mxu0 0.0
    %1279 = vmatprep.subr.mxu0 0.0
    %1280 = vmatpush2.msra.mxu0 0.0
    %1281 = vmatprep.subr.mxu0 0.0
    %1282 = vmatpush2.msra.mxu0 0.0
    %1283 = vmatprep.subr.mxu0 0.0
    %1284 = vmatpush2.msra.mxu0 0.0
    %1285 = vmatprep.subr.mxu0 0.0
    %1286 = vmatpush2.msra.mxu0 0.0
    %1287 = vmatprep.subr.mxu0 0.0
    %1288 = vmatpush2.msra.mxu0 0.0
    %1289 = vmatprep.subr.mxu0 0.0
    %1290 = vmatpush2.msra.mxu0 0.0
    %1291 = vmatprep.subr.mxu0 0.0
    %1292 = vmatpush2.msra.mxu0 0.0
    %1293 = vmatprep.subr.mxu0 0.0
    %1294 = vmatpush2.msra.mxu0 0.0
    %1295 = vmatprep.mubr.f32.mxu0 0.0
    %1296 = vmatmul.mubr.f32.gmra.mxu0 %v1226
    %v1297 = vpop.f32.mrf.mxu0
    %v1298 = vadd.f32 %v1223, %v1297
    %v1299 = vpop.f32.mrf.mxu0
    %1300 = vmatprep.mubr.f32.mxu0 0.0
    %1301 = vmatmul.mubr.f32.gmra.mxu0 %v1229
    %v1302 = vpop.f32.mrf.mxu0
    %v1303 = vadd.f32 %v1223, %v1302
    %v1304 = vpop.f32.mrf.mxu0
    %1305 = vdwg.mxu0
    %v1306 = vadd.f32 %v1298, %v1060
    %v1307 = vadd.f32 %v1303, %v1061
    %v1309 = vrot.slane %v1306, 4
    %1310 = vrot.lane.b32.xlu0 %v1309, 32
    %v1311 = vpop.permute.xlu0 %1310
    %1314 = vrot.lane.b32.xlu0 %v1307, 64
    %v1315 = vpop.permute.xlu0 %1314
    %v1317 = vrot.slane %v1307, 4
    %1318 = vrot.lane.b32.xlu0 %v1317, 96
    %v1319 = vpop.permute.xlu0 %1318
    %v1321 = vsel %vm43, %v1306, %v1311
    %v1322 = vsel %vm1224, %v1321, %v1315
    %vm1323 = vcmask 785408
    %v1324 = vsel %vm1323, %v1322, %v1319
    %1325 = vst [vmem:[#allocation5] sm:$0xf] %v1324
    // Predicated region
    $region22: #{tpu_custom_call.1} parent=1 // pred_check
      _
    $region23: #{tpu_custom_call.1} parent=1 // pred_check_branch
      %1327 = sbr.rel (0) target = $region25
    $region24: #{tpu_custom_call.1} parent=1 // pred_region
      %s1329 = ssub.s32 64, 64
      %1330 = vsyncadd [#allocation4], %s1329
      %s1332 = sshll.u32 [#allocation5], 4
      %s1333 = int_to_ptr.vmem [resolvable:$true] %s1332
      %1335 = dma.vmem_to_hbm [thread:$0]  %s1333, 64, %s4, [#allocation4]
    $region25: #{tpu_custom_call.1} parent=1 // pred_fallthru
      _
    // Predicated region
    $region26: #{tpu_custom_call.1} parent=1 // pred_check
      _
    $region27: #{tpu_custom_call.1} parent=1 // pred_check_branch
      %1337 = sbr.rel (0) target = $region29
    $region28: #{tpu_custom_call.1} parent=1 // pred_region
      %1338 = dma.done [#allocation4], 64
    $region29: #{tpu_custom_call.1} parent=1 // pred_fallthru
      _
    %1339 = vsyncpa [#allocation3], 1
    %1340 = vsyncpa [#allocation4], 1

</llo_original>
